<compile_context>
chip_gen: v6e
topology: v6e:2x2x1
jax: 0.10.0
libtpu: 0.0.40
codegen_flags: <defaults>
</compile_context>

<pallas_src>
import functools
import math

import jax
import jax.numpy as jnp
from jax.experimental import pallas as pl
from jax.experimental.pallas import tpu as pltpu


def _round_up(x, m):
    return ((x + m - 1) // m) * m


def _residual_block_kernel(x_ref, w_in_ref, b_in_ref, w_mid_ref, b_mid_ref,
                           w_out_ref, b_out_ref, w_skip_ref, b_skip_ref,
                           o_ref, *, t_real, pad):
    """One ResidualBlockII for one batch element, fully fused in VMEM.

    x_ref:      (1, T_pad, Cin_pad)  bf16 activations (channels-last)
    w_in_ref:   (Cin_pad, C_pad)     left 1x1 conv  (BN folded)   bf16
    w_mid_ref:  (K, C_pad, C_pad)    left k-tap conv (BN folded)  bf16
    w_out_ref:  (C_pad, C_pad)       left 1x1 conv  (BN folded)   bf16
    w_skip_ref: (Cin_pad, C_pad)     right 1x1 conv (BN folded)   bf16
    b_*_ref:    (1, C_pad)           folded biases                f32
    o_ref:      (1, T_pad, C_pad)    bf16
    """
    cdt = x_ref.dtype
    x = x_ref[0]                                           # (T_pad, Cin_pad)
    t_pad, c_pad = o_ref.shape[1], o_ref.shape[2]
    row = jax.lax.broadcasted_iota(jnp.int32, (t_pad, c_pad), 0)

    # ---- left branch, stage 1: 1x1 conv (+folded BN) + ReLU ---------------
    h = jnp.dot(x, w_in_ref[...], preferred_element_type=jnp.float32)
    h = jnp.maximum(h + b_in_ref[...], 0.0)
    # Zero padded time rows so the k-tap conv sees true zero padding.
    h = jnp.where(row < t_real, h, 0.0)

    # ---- left branch, stage 2: k-tap "same" conv (+folded BN) + ReLU ------
    K = w_mid_ref.shape[0]
    acc = jnp.zeros((t_pad, c_pad), jnp.float32)
    for k in range(K):
        off = k - pad                                      # tap reads h[t + off]
        if off == 0:
            tap = h
        else:
            tap = pltpu.roll(h, shift=(-off) % t_pad, axis=0)
            if off < 0:
                tap = jnp.where(row < -off, 0.0, tap)      # no t-1 before start
            else:
                tap = jnp.where(row >= t_pad - off, 0.0, tap)  # no wrap at end
        acc = acc + jnp.dot(tap.astype(cdt), w_mid_ref[k],
                            preferred_element_type=jnp.float32)
    m = jnp.maximum(acc + b_mid_ref[...], 0.0)

    # ---- left branch, stage 3: 1x1 conv (+folded BN) ----------------------
    left = jnp.dot(m.astype(cdt), w_out_ref[...],
                   preferred_element_type=jnp.float32) + b_out_ref[...]

    # ---- right branch: 1x1 conv (+folded BN) ------------------------------
    right = jnp.dot(x, w_skip_ref[...],
                    preferred_element_type=jnp.float32) + b_skip_ref[...]

    # ---- residual add + final ReLU; keep padded time rows exactly zero ----
    out = jnp.maximum(left + right, 0.0)
    out = jnp.where(row < t_real, out, 0.0)
    o_ref[0] = out.astype(o_ref.dtype)


def residual_block_forward(x, block, *, t_real, pad):
    """x: (B, T_pad, Cin_pad) bf16.  Returns (B, T_pad, C_pad) bf16."""
    B, t_pad, cin_pad = x.shape
    K, c_pad, _ = block["w_mid"].shape
    cdt = x.dtype
    itemsize = jnp.dtype(cdt).itemsize

    kernel = functools.partial(_residual_block_kernel, t_real=t_real, pad=pad)

    flops = 2 * B * t_pad * c_pad * (2 * cin_pad + (K + 1) * c_pad)
    bytes_accessed = (
        x.size * itemsize                                  # activations in
        + B * t_pad * c_pad * itemsize                     # activations out
        + (2 * cin_pad * c_pad + (K + 1) * c_pad * c_pad) * itemsize  # weights
        + 4 * c_pad * 4)                                   # biases (f32)

    return pl.pallas_call(
        kernel,
        out_shape=jax.ShapeDtypeStruct((B, t_pad, c_pad), cdt),
        grid_spec=pltpu.PrefetchScalarGridSpec(
            num_scalar_prefetch=0,
            grid=(B,),
            in_specs=[
                pl.BlockSpec((1, t_pad, cin_pad), lambda b: (b, 0, 0)),
                pl.BlockSpec((cin_pad, c_pad), lambda b: (0, 0)),
                pl.BlockSpec((1, c_pad), lambda b: (0, 0)),
                pl.BlockSpec((K, c_pad, c_pad), lambda b: (0, 0, 0)),
                pl.BlockSpec((1, c_pad), lambda b: (0, 0)),
                pl.BlockSpec((c_pad, c_pad), lambda b: (0, 0)),
                pl.BlockSpec((1, c_pad), lambda b: (0, 0)),
                pl.BlockSpec((cin_pad, c_pad), lambda b: (0, 0)),
                pl.BlockSpec((1, c_pad), lambda b: (0, 0)),
            ],
            out_specs=pl.BlockSpec((1, t_pad, c_pad), lambda b: (b, 0, 0)),
        ),
        compiler_params=pltpu.CompilerParams(
            dimension_semantics=("parallel",),          # batch axis -> megacore/2-TC
            vmem_limit_bytes=32 * 1024 * 1024,          # explicit (v5e default is 16 MiB)
        ),
        cost_estimate=pl.CostEstimate(
            flops=int(flops), transcendentals=0,
            bytes_accessed=int(bytes_accessed)),
    )(x, block["w_in"], block["b_in"], block["w_mid"], block["b_mid"],
      block["w_out"], block["b_out"], block["w_skip"], block["b_skip"])


class TCNModulePallas:
    """JAX/Pallas port of TCN_module (stack of ResidualBlockII), eval-mode BN."""

    EPS = 1e-5

    def __init__(self, n_layers, in_channels, out_channels, kernel_size=3,
                 *, key, compute_dtype=jnp.bfloat16):
        assert kernel_size % 2 == 1, "only odd kernel sizes give 'same' padding"
        self.n_layers = n_layers
        self.in_channels = in_channels
        self.out_channels = out_channels
        self.kernel_size = kernel_size
        self.pad = (kernel_size - 1) // 2
        self.compute_dtype = compute_dtype

        self.c_pad = _round_up(out_channels, 128)     # lane-dense channels
        self.cin_pad = _round_up(in_channels, 128)

        keys = jax.random.split(key, n_layers)
        self.raw_blocks = []
        cin = in_channels
        for i in range(n_layers):
            self.raw_blocks.append(
                self._init_block(keys[i], cin, out_channels, kernel_size))
            cin = out_channels
        self.blocks = [
            self._fold_and_pad(p, self.cin_pad if i == 0 else self.c_pad)
            for i, p in enumerate(self.raw_blocks)
        ]

    # ----- parameter init (mimics torch defaults; BN stats randomized) -----
    @staticmethod
    def _init_conv(key, cin, cout, k):
        bound = 1.0 / math.sqrt(cin * k)
        kw, kb = jax.random.split(key)
        shape = (cin, cout) if k == 1 else (k, cin, cout)   # input-major
        w = jax.random.uniform(kw, shape, jnp.float32, -bound, bound)
        b = jax.random.uniform(kb, (cout,), jnp.float32, -bound, bound)
        return w, b

    @staticmethod
    def _init_bn(key, c):
        k1, k2, k3, k4 = jax.random.split(key, 4)
        gamma = jax.random.uniform(k1, (c,), jnp.float32, 0.8, 1.2)
        beta = jax.random.uniform(k2, (c,), jnp.float32, -0.1, 0.1)
        mean = jax.random.uniform(k3, (c,), jnp.float32, -0.1, 0.1)
        var = jax.random.uniform(k4, (c,), jnp.float32, 0.8, 1.2)
        return gamma, beta, mean, var

    def _init_block(self, key, cin, cout, k):
        ks = jax.random.split(key, 8)
        return {
            "conv_l1": self._init_conv(ks[0], cin, cout, 1),
            "bn_l1": self._init_bn(ks[1], cout),
            "conv_l2": self._init_conv(ks[2], cout, cout, k),
            "bn_l2": self._init_bn(ks[3], cout),
            "conv_l3": self._init_conv(ks[4], cout, cout, 1),
            "bn_l3": self._init_bn(ks[5], cout),
            "conv_r": self._init_conv(ks[6], cin, cout, 1),
            "bn_r": self._init_bn(ks[7], cout),
        }

    # ----- fold eval-mode BatchNorm into the preceding conv, pad, cast -----
    def _fold(self, conv, bn):
        w, b = conv
        gamma, beta, mean, var = bn
        scale = gamma / jnp.sqrt(var + self.EPS)
        return w * scale, (b - mean) * scale + beta

    def _pad_w(self, w, cin_pad):
        pads = [(0, 0)] * (w.ndim - 2) + [(0, cin_pad - w.shape[-2]),
                                          (0, self.c_pad - w.shape[-1])]
        return jnp.pad(w, pads).astype(self.compute_dtype)

    def _pad_b(self, b):
        return jnp.pad(b, (0, self.c_pad - b.shape[0])).reshape(1, self.c_pad)

    def _fold_and_pad(self, p, cin_pad):
        w_in, b_in = self._fold(p["conv_l1"], p["bn_l1"])
        w_mid, b_mid = self._fold(p["conv_l2"], p["bn_l2"])
        w_out, b_out = self._fold(p["conv_l3"], p["bn_l3"])
        w_skip, b_skip = self._fold(p["conv_r"], p["bn_r"])
        return {
            "w_in": self._pad_w(w_in, cin_pad), "b_in": self._pad_b(b_in),
            "w_mid": self._pad_w(w_mid, self.c_pad), "b_mid": self._pad_b(b_mid),
            "w_out": self._pad_w(w_out, self.c_pad), "b_out": self._pad_b(b_out),
            "w_skip": self._pad_w(w_skip, cin_pad), "b_skip": self._pad_b(b_skip),
        }

    # ----- forward ----------------------------------------------------------
    def __call__(self, x):
        """x: (B, in_channels, T) f32 (torch Conv1d layout) -> (B, out_channels, T) f32."""
        B, cin, T = x.shape
        assert cin == self.in_channels
        t_pad = _round_up(T, 8)

        h = jnp.transpose(x, (0, 2, 1))                     # channels-last
        h = jnp.pad(h, ((0, 0), (0, t_pad - T), (0, self.cin_pad - cin)))
        h = h.astype(self.compute_dtype)
        for blk in self.blocks:
            h = residual_block_forward(h, blk, t_real=T, pad=self.pad)
        h = h[:, :T, :self.out_channels].astype(jnp.float32)
        return jnp.transpose(h, (0, 2, 1))

    # ----- pure-JAX f32 reference (exact eval-mode module semantics) -------
    def reference(self, x):
        eps = self.EPS

        def conv1x1(a, w, b):
            return jnp.einsum("btc,co->bto", a, w) + b

        def convk(a, w, b):
            K = w.shape[0]
            p = (K - 1) // 2
            T = a.shape[1]
            ap = jnp.pad(a, ((0, 0), (p, p), (0, 0)))
            out = jnp.zeros(a.shape[:2] + (w.shape[-1],), jnp.float32) + b
            for k in range(K):
                out = out + jnp.einsum("btc,co->bto", ap[:, k:k + T, :], w[k])
            return out

        def bn(z, g, beta, mean, var):
            return (z - mean) * (g / jnp.sqrt(var + eps)) + beta

        h = jnp.transpose(x, (0, 2, 1)).astype(jnp.float32)
        for p in self.raw_blocks:
            l = jax.nn.relu(bn(conv1x1(h, *p["conv_l1"]), *p["bn_l1"]))
            l = jax.nn.relu(bn(convk(l, *p["conv_l2"]), *p["bn_l2"]))
            l = bn(conv1x1(l, *p["conv_l3"]), *p["bn_l3"])
            r = bn(conv1x1(h, *p["conv_r"]), *p["bn_r"])
            h = jax.nn.relu(l + r)
        return jnp.transpose(h, (0, 2, 1))


if __name__ == "__main__":
    key = jax.random.PRNGKey(0)
    k_model, k_x = jax.random.split(key)

    batch, in_channels, seq_len = 2, 4, 64
    n_layers, out_channels, kernel_size = 2, 256, 3

    model = TCNModulePallas(n_layers, in_channels, out_channels, kernel_size,
                            key=k_model)
    x = jax.random.normal(k_x, (batch, in_channels, seq_len), jnp.float32)

    out = jax.block_until_ready(model(x))
    assert out.shape == (batch, out_channels, seq_len)

    ref = jax.block_until_ready(model.reference(x))
    # bf16 matmul operands + f32 accumulation vs. pure-f32 reference.
    assert jnp.allclose(out, ref, atol=5e-2, rtol=5e-2), (
        f"max abs err {float(jnp.max(jnp.abs(out - ref)))}")

    print("KERNEL_OK")
</pallas_src>

<mosaic_0001>
module attributes {stable_mosaic.version = 11 : i64} {
  func.func @_residual_block_kernel(%arg0: i32, %arg1: memref<1x64x128xbf16, #tpu.memory_space<vmem>>, %arg2: memref<128x256xbf16, #tpu.memory_space<vmem>>, %arg3: memref<1x256xf32, #tpu.memory_space<vmem>>, %arg4: memref<3x256x256xbf16, #tpu.memory_space<vmem>>, %arg5: memref<1x256xf32, #tpu.memory_space<vmem>>, %arg6: memref<256x256xbf16, #tpu.memory_space<vmem>>, %arg7: memref<1x256xf32, #tpu.memory_space<vmem>>, %arg8: memref<128x256xbf16, #tpu.memory_space<vmem>>, %arg9: memref<1x256xf32, #tpu.memory_space<vmem>>, %arg10: memref<1x64x256xbf16, #tpu.memory_space<vmem>>) attributes {dimension_semantics = [#tpu.dimension_semantics<parallel>], iteration_bounds = array<i64: 2>, scalar_prefetch = 0 : i64, scratch_operands = 0 : i64, tpu.core_type = #tpu.core_type<tc>, window_params = [{transform_indices = @transform_0, window_bounds = array<i64: 1, 64, 128>}, {pipeline_mode = #tpu.pipeline_mode<synchronous>, transform_indices = @transform_1, window_bounds = array<i64: 128, 256>}, {pipeline_mode = #tpu.pipeline_mode<synchronous>, transform_indices = @transform_2, window_bounds = array<i64: 1, 256>}, {pipeline_mode = #tpu.pipeline_mode<synchronous>, transform_indices = @transform_3, window_bounds = array<i64: 3, 256, 256>}, {pipeline_mode = #tpu.pipeline_mode<synchronous>, transform_indices = @transform_4, window_bounds = array<i64: 1, 256>}, {pipeline_mode = #tpu.pipeline_mode<synchronous>, transform_indices = @transform_5, window_bounds = array<i64: 256, 256>}, {pipeline_mode = #tpu.pipeline_mode<synchronous>, transform_indices = @transform_6, window_bounds = array<i64: 1, 256>}, {pipeline_mode = #tpu.pipeline_mode<synchronous>, transform_indices = @transform_7, window_bounds = array<i64: 128, 256>}, {pipeline_mode = #tpu.pipeline_mode<synchronous>, transform_indices = @transform_8, window_bounds = array<i64: 1, 256>}, {transform_indices = @transform_9, window_bounds = array<i64: 1, 64, 256>}]} {
    %c0 = arith.constant 0 : index
    %c0_0 = arith.constant 0 : index
    %c0_1 = arith.constant 0 : index
    %0 = vector.load %arg1[%c0, %c0_0, %c0_1] : memref<1x64x128xbf16, #tpu.memory_space<vmem>>, vector<1x64x128xbf16>
    %1 = vector.shape_cast %0 : vector<1x64x128xbf16> to vector<64x128xbf16>
    %2 = tpu.iota {dimensions = array<i32: 0>} : vector<64x256xi32>
    %c0_2 = arith.constant 0 : index
    %c0_3 = arith.constant 0 : index
    %3 = vector.load %arg2[%c0_2, %c0_3] : memref<128x256xbf16, #tpu.memory_space<vmem>>, vector<128x256xbf16>
    %cst = arith.constant dense<0.000000e+00> : vector<64x256xf32>
    %4 = tpu.matmul %1, %3, %cst {dimension_numbers = #tpu.dot_dimension_numbers<[1], [0], [0], [1], [0, 0, 1, 1], [], []>} : vector<64x128xbf16>, vector<128x256xbf16>, vector<64x256xf32> -> vector<64x256xf32>
    %c0_4 = arith.constant 0 : index
    %c0_5 = arith.constant 0 : index
    %5 = vector.load %arg3[%c0_4, %c0_5] : memref<1x256xf32, #tpu.memory_space<vmem>>, vector<1x256xf32>
    %6 = vector.broadcast %5 : vector<1x256xf32> to vector<64x256xf32>
    %7 = arith.addf %4, %6 : vector<64x256xf32>
    %cst_6 = arith.constant 0.000000e+00 : f32
    %8 = vector.broadcast %cst_6 : f32 to vector<64x256xf32>
    %9 = arith.maximumf %7, %8 : vector<64x256xf32>
    %c64_i32 = arith.constant 64 : i32
    %10 = vector.broadcast %c64_i32 : i32 to vector<64x256xi32>
    %11 = arith.cmpi slt, %2, %10 : vector<64x256xi32>
    %cst_7 = arith.constant 0.000000e+00 : f32
    %12 = vector.broadcast %cst_7 : f32 to vector<64x256xf32>
    %13 = arith.select %11, %9, %12 : vector<64x256xi1>, vector<64x256xf32>
    %cst_8 = arith.constant 0.000000e+00 : f32
    %14 = vector.broadcast %cst_8 : f32 to vector<64x256xf32>
    %c1_i32 = arith.constant 1 : i32
    %15 = tpu.dynamic_rotate %13 by %c1_i32 dim 0 : vector<64x256xf32>, i32 -> vector<64x256xf32>
    %c1_i32_9 = arith.constant 1 : i32
    %16 = vector.broadcast %c1_i32_9 : i32 to vector<64x256xi32>
    %17 = arith.cmpi slt, %2, %16 : vector<64x256xi32>
    %cst_10 = arith.constant 0.000000e+00 : f32
    %18 = vector.broadcast %cst_10 : f32 to vector<64x256xf32>
    %19 = arith.select %17, %18, %15 : vector<64x256xi1>, vector<64x256xf32>
    %20 = arith.truncf %19 : vector<64x256xf32> to vector<64x256xbf16>
    %c0_11 = arith.constant 0 : index
    %c0_12 = arith.constant 0 : index
    %c0_13 = arith.constant 0 : index
    %21 = vector.load %arg4[%c0_11, %c0_12, %c0_13] : memref<3x256x256xbf16, #tpu.memory_space<vmem>>, vector<1x256x256xbf16>
    %22 = vector.shape_cast %21 : vector<1x256x256xbf16> to vector<256x256xbf16>
    %cst_14 = arith.constant dense<0.000000e+00> : vector<64x256xf32>
    %23 = tpu.matmul %20, %22, %cst_14 {dimension_numbers = #tpu.dot_dimension_numbers<[1], [0], [0], [1], [0, 0, 1, 1], [], []>} : vector<64x256xbf16>, vector<256x256xbf16>, vector<64x256xf32> -> vector<64x256xf32>
    %24 = arith.addf %14, %23 : vector<64x256xf32>
    %25 = arith.truncf %13 : vector<64x256xf32> to vector<64x256xbf16>
    %c1 = arith.constant 1 : index
    %c0_15 = arith.constant 0 : index
    %c0_16 = arith.constant 0 : index
    %26 = vector.load %arg4[%c1, %c0_15, %c0_16] : memref<3x256x256xbf16, #tpu.memory_space<vmem>>, vector<1x256x256xbf16>
    %27 = vector.shape_cast %26 : vector<1x256x256xbf16> to vector<256x256xbf16>
    %cst_17 = arith.constant dense<0.000000e+00> : vector<64x256xf32>
    %28 = tpu.matmul %25, %27, %cst_17 {dimension_numbers = #tpu.dot_dimension_numbers<[1], [0], [0], [1], [0, 0, 1, 1], [], []>} : vector<64x256xbf16>, vector<256x256xbf16>, vector<64x256xf32> -> vector<64x256xf32>
    %29 = arith.addf %24, %28 : vector<64x256xf32>
    %c63_i32 = arith.constant 63 : i32
    %30 = tpu.dynamic_rotate %13 by %c63_i32 dim 0 : vector<64x256xf32>, i32 -> vector<64x256xf32>
    %c63_i32_18 = arith.constant 63 : i32
    %31 = vector.broadcast %c63_i32_18 : i32 to vector<64x256xi32>
    %32 = arith.cmpi sge, %2, %31 : vector<64x256xi32>
    %cst_19 = arith.constant 0.000000e+00 : f32
    %33 = vector.broadcast %cst_19 : f32 to vector<64x256xf32>
    %34 = arith.select %32, %33, %30 : vector<64x256xi1>, vector<64x256xf32>
    %35 = arith.truncf %34 : vector<64x256xf32> to vector<64x256xbf16>
    %c2 = arith.constant 2 : index
    %c0_20 = arith.constant 0 : index
    %c0_21 = arith.constant 0 : index
    %36 = vector.load %arg4[%c2, %c0_20, %c0_21] : memref<3x256x256xbf16, #tpu.memory_space<vmem>>, vector<1x256x256xbf16>
    %37 = vector.shape_cast %36 : vector<1x256x256xbf16> to vector<256x256xbf16>
    %cst_22 = arith.constant dense<0.000000e+00> : vector<64x256xf32>
    %38 = tpu.matmul %35, %37, %cst_22 {dimension_numbers = #tpu.dot_dimension_numbers<[1], [0], [0], [1], [0, 0, 1, 1], [], []>} : vector<64x256xbf16>, vector<256x256xbf16>, vector<64x256xf32> -> vector<64x256xf32>
    %39 = arith.addf %29, %38 : vector<64x256xf32>
    %c0_23 = arith.constant 0 : index
    %c0_24 = arith.constant 0 : index
    %40 = vector.load %arg5[%c0_23, %c0_24] : memref<1x256xf32, #tpu.memory_space<vmem>>, vector<1x256xf32>
    %41 = vector.broadcast %40 : vector<1x256xf32> to vector<64x256xf32>
    %42 = arith.addf %39, %41 : vector<64x256xf32>
    %cst_25 = arith.constant 0.000000e+00 : f32
    %43 = vector.broadcast %cst_25 : f32 to vector<64x256xf32>
    %44 = arith.maximumf %42, %43 : vector<64x256xf32>
    %45 = arith.truncf %44 : vector<64x256xf32> to vector<64x256xbf16>
    %c0_26 = arith.constant 0 : index
    %c0_27 = arith.constant 0 : index
    %46 = vector.load %arg6[%c0_26, %c0_27] : memref<256x256xbf16, #tpu.memory_space<vmem>>, vector<256x256xbf16>
    %cst_28 = arith.constant dense<0.000000e+00> : vector<64x256xf32>
    %47 = tpu.matmul %45, %46, %cst_28 {dimension_numbers = #tpu.dot_dimension_numbers<[1], [0], [0], [1], [0, 0, 1, 1], [], []>} : vector<64x256xbf16>, vector<256x256xbf16>, vector<64x256xf32> -> vector<64x256xf32>
    %c0_29 = arith.constant 0 : index
    %c0_30 = arith.constant 0 : index
    %48 = vector.load %arg7[%c0_29, %c0_30] : memref<1x256xf32, #tpu.memory_space<vmem>>, vector<1x256xf32>
    %49 = vector.broadcast %48 : vector<1x256xf32> to vector<64x256xf32>
    %50 = arith.addf %47, %49 : vector<64x256xf32>
    %c0_31 = arith.constant 0 : index
    %c0_32 = arith.constant 0 : index
    %51 = vector.load %arg8[%c0_31, %c0_32] : memref<128x256xbf16, #tpu.memory_space<vmem>>, vector<128x256xbf16>
    %cst_33 = arith.constant dense<0.000000e+00> : vector<64x256xf32>
    %52 = tpu.matmul %1, %51, %cst_33 {dimension_numbers = #tpu.dot_dimension_numbers<[1], [0], [0], [1], [0, 0, 1, 1], [], []>} : vector<64x128xbf16>, vector<128x256xbf16>, vector<64x256xf32> -> vector<64x256xf32>
    %c0_34 = arith.constant 0 : index
    %c0_35 = arith.constant 0 : index
    %53 = vector.load %arg9[%c0_34, %c0_35] : memref<1x256xf32, #tpu.memory_space<vmem>>, vector<1x256xf32>
    %54 = vector.broadcast %53 : vector<1x256xf32> to vector<64x256xf32>
    %55 = arith.addf %52, %54 : vector<64x256xf32>
    %56 = arith.addf %50, %55 : vector<64x256xf32>
    %cst_36 = arith.constant 0.000000e+00 : f32
    %57 = vector.broadcast %cst_36 : f32 to vector<64x256xf32>
    %58 = arith.maximumf %56, %57 : vector<64x256xf32>
    %c64_i32_37 = arith.constant 64 : i32
    %59 = vector.broadcast %c64_i32_37 : i32 to vector<64x256xi32>
    %60 = arith.cmpi slt, %2, %59 : vector<64x256xi32>
    %cst_38 = arith.constant 0.000000e+00 : f32
    %61 = vector.broadcast %cst_38 : f32 to vector<64x256xf32>
    %62 = arith.select %60, %58, %61 : vector<64x256xi1>, vector<64x256xf32>
    %63 = arith.truncf %62 : vector<64x256xf32> to vector<64x256xbf16>
    %c0_39 = arith.constant 0 : index
    %c0_40 = arith.constant 0 : index
    %c0_41 = arith.constant 0 : index
    %64 = vector.load %arg10[%c0_39, %c0_40, %c0_41] : memref<1x64x256xbf16, #tpu.memory_space<vmem>>, vector<1x64x256xbf16>
    %65 = vector.shape_cast %64 : vector<1x64x256xbf16> to vector<64x256xbf16>
    %66 = vector.shape_cast %63 : vector<64x256xbf16> to vector<1x64x256xbf16>
    tpu.vector_store %arg10[%c0_39, %c0_40, %c0_41], %66 {strides = array<i32>} : memref<1x64x256xbf16, #tpu.memory_space<vmem>>, vector<1x64x256xbf16>,
    return
  }
  func.func @transform_0(%arg0: i32) -> (i32, i32, i32) {
    %c0_i32 = arith.constant 0 : i32
    %c0_i32_0 = arith.constant 0 : i32
    %c0_i32_1 = arith.constant 0 : i32
    return %arg0, %c0_i32, %c0_i32_0 : i32, i32, i32
  }
  func.func @transform_1(%arg0: i32) -> (i32, i32) {
    %c0_i32 = arith.constant 0 : i32
    %c0_i32_0 = arith.constant 0 : i32
    %c0_i32_1 = arith.constant 0 : i32
    return %c0_i32, %c0_i32_0 : i32, i32
  }
  func.func @transform_2(%arg0: i32) -> (i32, i32) {
    %c0_i32 = arith.constant 0 : i32
    %c0_i32_0 = arith.constant 0 : i32
    %c0_i32_1 = arith.constant 0 : i32
    return %c0_i32, %c0_i32_0 : i32, i32
  }
  func.func @transform_3(%arg0: i32) -> (i32, i32, i32) {
    %c0_i32 = arith.constant 0 : i32
    %c0_i32_0 = arith.constant 0 : i32
    %c0_i32_1 = arith.constant 0 : i32
    %c0_i32_2 = arith.constant 0 : i32
    return %c0_i32, %c0_i32_0, %c0_i32_1 : i32, i32, i32
  }
  func.func @transform_4(%arg0: i32) -> (i32, i32) {
    %c0_i32 = arith.constant 0 : i32
    %c0_i32_0 = arith.constant 0 : i32
    %c0_i32_1 = arith.constant 0 : i32
    return %c0_i32, %c0_i32_0 : i32, i32
  }
  func.func @transform_5(%arg0: i32) -> (i32, i32) {
    %c0_i32 = arith.constant 0 : i32
    %c0_i32_0 = arith.constant 0 : i32
    %c0_i32_1 = arith.constant 0 : i32
    return %c0_i32, %c0_i32_0 : i32, i32
  }
  func.func @transform_6(%arg0: i32) -> (i32, i32) {
    %c0_i32 = arith.constant 0 : i32
    %c0_i32_0 = arith.constant 0 : i32
    %c0_i32_1 = arith.constant 0 : i32
    return %c0_i32, %c0_i32_0 : i32, i32
  }
  func.func @transform_7(%arg0: i32) -> (i32, i32) {
    %c0_i32 = arith.constant 0 : i32
    %c0_i32_0 = arith.constant 0 : i32
    %c0_i32_1 = arith.constant 0 : i32
    return %c0_i32, %c0_i32_0 : i32, i32
  }
  func.func @transform_8(%arg0: i32) -> (i32, i32) {
    %c0_i32 = arith.constant 0 : i32
    %c0_i32_0 = arith.constant 0 : i32
    %c0_i32_1 = arith.constant 0 : i32
    return %c0_i32, %c0_i32_0 : i32, i32
  }
  func.func @transform_9(%arg0: i32) -> (i32, i32, i32) {
    %c0_i32 = arith.constant 0 : i32
    %c0_i32_0 = arith.constant 0 : i32
    %c0_i32_1 = arith.constant 0 : i32
    return %arg0, %c0_i32, %c0_i32_0 : i32, i32, i32
  }
}

</mosaic_0001>

<llo_original>
// kernel: tpu_custom_call.1
$region0: #{tpu_custom_call.1}
  #allocation0 [shape = 'u32[]', space=smem, size = 0x4, offset = 0x4, fixed_abs, tag = 'smem constant byte address 0x4 - core index']
  #allocation1 [shape = 'u32[144,128]{1,0:T(1,128)}', space=vmem, size = 0x12000, scoped, tag = 'internal scratch']
  %s0 = inlined_call_operand.hbm [shape: bf16[2,64,128], index: 0, kind: input, shape index: {}]
  %s1 = inlined_call_operand.hbm [shape: bf16[128,256], index: 1, kind: input, shape index: {}]
  %s2 = inlined_call_operand.vmem [shape: f32[1,256], index: 2, kind: input, shape index: {}]
  %s3 = inlined_call_operand.hbm [shape: bf16[3,256,256], index: 3, kind: input, shape index: {}]
  %s4 = inlined_call_operand.vmem [shape: f32[1,256], index: 4, kind: input, shape index: {}]
  %s5 = inlined_call_operand.hbm [shape: bf16[256,256], index: 5, kind: input, shape index: {}]
  %s6 = inlined_call_operand.vmem [shape: f32[1,256], index: 6, kind: input, shape index: {}]
  %s7 = inlined_call_operand.hbm [shape: bf16[128,256], index: 7, kind: input, shape index: {}]
  %s8 = inlined_call_operand.vmem [shape: f32[1,256], index: 8, kind: input, shape index: {}]
  %s9 = inlined_call_operand.hbm [shape: bf16[2,64,256], index: 9, kind: output, shape index: {}]
  %s10 = sld [smem:[#allocation0]]
  $region89: #{tpu_custom_call.1} parent=0
    _
  %s12 = ssub.s32 1, %s10
  %s13 = scalar_select 0, %s12, %s10
  $region1: #{tpu_custom_call.1} parent=0
    #allocation2 [shape = 'u8[32768]{0}', space=vmem, size = 0x8000, scoped, tag = 'input window, operand 0']
    #allocation3 [shape = 's32[2]{0}', space=sflag, size = 0x8, scoped, tag = 'scoped memory for tpu_custom_call.1']
    #allocation4 [shape = 's32[2]{0}', space=sflag, size = 0x8, scoped, tag = 'scoped memory for tpu_custom_call.1']
    #allocation5 [shape = 'u8[65536]{0}', space=vmem, size = 0x10000, scoped, tag = 'input window, operand 1, single buffered']
    #allocation6 [shape = 's32[1]{0}', space=sflag, size = 0x4, scoped, tag = 'scoped memory for tpu_custom_call.1']
    #allocation7 [shape = 'u8[393216]{0}', space=vmem, size = 0x60000, scoped, tag = 'input window, operand 3, single buffered']
    #allocation8 [shape = 'u8[131072]{0}', space=vmem, size = 0x20000, scoped, tag = 'input window, operand 5, single buffered']
    #allocation9 [shape = 's32[1]{0}', space=sflag, size = 0x4, scoped, tag = 'scoped memory for tpu_custom_call.1']
    #allocation10 [shape = 'u8[65536]{0}', space=vmem, size = 0x10000, scoped, tag = 'input window, operand 7, single buffered']
    #allocation11 [shape = 'u8[65536]{0}', space=vmem, size = 0x10000, scoped, tag = 'output window, operand 0']
    %14 = vsyncpa [#allocation3], 0
    %s15 = scalar_lea.sflag [#allocation3], 1
    %16 = vsyncpa %s15, 0
    %17 = vsyncpa [#allocation6], 0
    %18 = vsyncpa [#allocation9], 0
    %19 = vsyncpa [#allocation4], 0
    %s20 = scalar_lea.sflag [#allocation4], 1
    %21 = vsyncpa %s20, 0
    loop: start=0, step=1, limit=4
    $region2: #{tpu_custom_call.1} parent=1 // loop_pre_header
      _
    $region3: #{tpu_custom_call.1} parent=1 // loop_header
      %s23 = sphi 0, %s27
      %p24 = scmp.ge.s32.totalorder %s23, 4
      %s33 = sphi 0, %s35
      %s36 = sphi 0, %s33
      %s37 = sphi 0, %s36
      %s53 = sphi 0, %s37
      %s57 = sphi 0, %s57
      %s59 = sphi 0, %s57
      %s60 = sphi 0, %s59
      %s74 = sphi 0, %s60
      %s78 = sphi 0, %s78
      %s80 = sphi 0, %s78
      %s81 = sphi 0, %s80
      %s95 = sphi 0, %s81
      %s99 = sphi 0, %s99
      %s101 = sphi 0, %s99
      %s102 = sphi 0, %s101
      %s116 = sphi 0, %s102
      %s120 = sphi 0, %s120
      %s122 = sphi 0, %s120
      %s123 = sphi 0, %s122
      %s137 = sphi 0, %s123
      %s141 = sphi 0, %s141
      %s143 = sphi 0, %s141
      %s144 = sphi 0, %s143
      %s158 = sphi 0, %s144
      %s162 = sphi 0, %s162
      %s164 = sphi 0, %s162
      %s165 = sphi 0, %s164
      %s179 = sphi 0, %s165
      %s183 = sphi 0, %s183
      %s185 = sphi 0, %s183
      %s186 = sphi 0, %s185
      %s200 = sphi 0, %s186
      %s204 = sphi 0, %s204
      %s206 = sphi 0, %s204
      %s207 = sphi 0, %s206
      %s221 = sphi 0, %s207
      %s227 = sphi 0, %s229
      %s230 = sphi 0, %s227
      %s231 = sphi 0, %s230
      %s247 = sphi 0, %s231
    $region4: #{tpu_custom_call.1} parent=1 // loop_header_branch
      %26 = sbr.rel (%p24) target = $region8
    $region5: #{tpu_custom_call.1} parent=1 // loop_body
      %s28 = ssub.s32 %s23, 1
      %s29 = ssub.s32 %s23, 2
      %s30 = sadd.s32 %s23, 1
      %s31 = ssub.s32 %s23, %s30
      %p32 = scmp.eq.s32.totalorder %s31, 0
      %s34 = sadd.s32 %s33, 1
      %s35 = scalar_select %p32, %s33, %s34
      %p38 = pneg %p32
      %p39 = scmp.eq.s32.totalorder %s23, 1
      %p40 = por %p38, %p39
      %p41 = scmp.ne.s32.totalorder %s33, %s36
      %p42 = scmp.eq.s32.totalorder %s23, 0
      %p43 = por %p41, %p42
      %p44 = scmp.ne.s32.totalorder %s33, %s36
      %p45 = scmp.eq.s32.totalorder %s28, 1
      %p46 = por %p44, %p45
      %p47 = scmp.ne.s32.totalorder %s36, %s37
      %p48 = scmp.eq.s32.totalorder %s28, 0
      %p49 = por %p47, %p48
      %p50 = scmp.ne.s32.totalorder %s36, %s37
      %p51 = scmp.eq.s32.totalorder %s29, 1
      %p52 = por %p50, %p51
      %p54 = scmp.ne.s32.totalorder %s37, %s53
      %p55 = scmp.eq.s32.totalorder %s29, 0
      %p56 = por %p54, %p55
      %s58 = sadd.s32 %s57, 1
      %p61 = scmp.eq.s32.totalorder %s23, 1
      %p62 = scmp.ne.s32.totalorder %s57, %s59
      %p63 = scmp.eq.s32.totalorder %s23, 0
      %p64 = por %p62, %p63
      %p65 = scmp.ne.s32.totalorder %s57, %s59
      %p66 = scmp.eq.s32.totalorder %s28, 1
      %p67 = por %p65, %p66
      %p68 = scmp.ne.s32.totalorder %s59, %s60
      %p69 = scmp.eq.s32.totalorder %s28, 0
      %p70 = por %p68, %p69
      %p71 = scmp.ne.s32.totalorder %s59, %s60
      %p72 = scmp.eq.s32.totalorder %s29, 1
      %p73 = por %p71, %p72
      %p75 = scmp.ne.s32.totalorder %s60, %s74
      %p76 = scmp.eq.s32.totalorder %s29, 0
      %p77 = por %p75, %p76
      %s79 = sadd.s32 %s78, 1
      %p82 = scmp.eq.s32.totalorder %s23, 1
      %p83 = scmp.ne.s32.totalorder %s78, %s80
      %p84 = scmp.eq.s32.totalorder %s23, 0
      %p85 = por %p83, %p84
      %p86 = scmp.ne.s32.totalorder %s78, %s80
      %p87 = scmp.eq.s32.totalorder %s28, 1
      %p88 = por %p86, %p87
      %p89 = scmp.ne.s32.totalorder %s80, %s81
      %p90 = scmp.eq.s32.totalorder %s28, 0
      %p91 = por %p89, %p90
      %p92 = scmp.ne.s32.totalorder %s80, %s81
      %p93 = scmp.eq.s32.totalorder %s29, 1
      %p94 = por %p92, %p93
      %p96 = scmp.ne.s32.totalorder %s81, %s95
      %p97 = scmp.eq.s32.totalorder %s29, 0
      %p98 = por %p96, %p97
      %s100 = sadd.s32 %s99, 1
      %p103 = scmp.eq.s32.totalorder %s23, 1
      %p104 = scmp.ne.s32.totalorder %s99, %s101
      %p105 = scmp.eq.s32.totalorder %s23, 0
      %p106 = por %p104, %p105
      %p107 = scmp.ne.s32.totalorder %s99, %s101
      %p108 = scmp.eq.s32.totalorder %s28, 1
      %p109 = por %p107, %p108
      %p110 = scmp.ne.s32.totalorder %s101, %s102
      %p111 = scmp.eq.s32.totalorder %s28, 0
      %p112 = por %p110, %p111
      %p113 = scmp.ne.s32.totalorder %s101, %s102
      %p114 = scmp.eq.s32.totalorder %s29, 1
      %p115 = por %p113, %p114
      %p117 = scmp.ne.s32.totalorder %s102, %s116
      %p118 = scmp.eq.s32.totalorder %s29, 0
      %p119 = por %p117, %p118
      %s121 = sadd.s32 %s120, 1
      %p124 = scmp.eq.s32.totalorder %s23, 1
      %p125 = scmp.ne.s32.totalorder %s120, %s122
      %p126 = scmp.eq.s32.totalorder %s23, 0
      %p127 = por %p125, %p126
      %p128 = scmp.ne.s32.totalorder %s120, %s122
      %p129 = scmp.eq.s32.totalorder %s28, 1
      %p130 = por %p128, %p129
      %p131 = scmp.ne.s32.totalorder %s122, %s123
      %p132 = scmp.eq.s32.totalorder %s28, 0
      %p133 = por %p131, %p132
      %p134 = scmp.ne.s32.totalorder %s122, %s123
      %p135 = scmp.eq.s32.totalorder %s29, 1
      %p136 = por %p134, %p135
      %p138 = scmp.ne.s32.totalorder %s123, %s137
      %p139 = scmp.eq.s32.totalorder %s29, 0
      %p140 = por %p138, %p139
      %s142 = sadd.s32 %s141, 1
      %p145 = scmp.eq.s32.totalorder %s23, 1
      %p146 = scmp.ne.s32.totalorder %s141, %s143
      %p147 = scmp.eq.s32.totalorder %s23, 0
      %p148 = por %p146, %p147
      %p149 = scmp.ne.s32.totalorder %s141, %s143
      %p150 = scmp.eq.s32.totalorder %s28, 1
      %p151 = por %p149, %p150
      %p152 = scmp.ne.s32.totalorder %s143, %s144
      %p153 = scmp.eq.s32.totalorder %s28, 0
      %p154 = por %p152, %p153
      %p155 = scmp.ne.s32.totalorder %s143, %s144
      %p156 = scmp.eq.s32.totalorder %s29, 1
      %p157 = por %p155, %p156
      %p159 = scmp.ne.s32.totalorder %s144, %s158
      %p160 = scmp.eq.s32.totalorder %s29, 0
      %p161 = por %p159, %p160
      %s163 = sadd.s32 %s162, 1
      %p166 = scmp.eq.s32.totalorder %s23, 1
      %p167 = scmp.ne.s32.totalorder %s162, %s164
      %p168 = scmp.eq.s32.totalorder %s23, 0
      %p169 = por %p167, %p168
      %p170 = scmp.ne.s32.totalorder %s162, %s164
      %p171 = scmp.eq.s32.totalorder %s28, 1
      %p172 = por %p170, %p171
      %p173 = scmp.ne.s32.totalorder %s164, %s165
      %p174 = scmp.eq.s32.totalorder %s28, 0
      %p175 = por %p173, %p174
      %p176 = scmp.ne.s32.totalorder %s164, %s165
      %p177 = scmp.eq.s32.totalorder %s29, 1
      %p178 = por %p176, %p177
      %p180 = scmp.ne.s32.totalorder %s165, %s179
      %p181 = scmp.eq.s32.totalorder %s29, 0
      %p182 = por %p180, %p181
      %s184 = sadd.s32 %s183, 1
      %p187 = scmp.eq.s32.totalorder %s23, 1
      %p188 = scmp.ne.s32.totalorder %s183, %s185
      %p189 = scmp.eq.s32.totalorder %s23, 0
      %p190 = por %p188, %p189
      %p191 = scmp.ne.s32.totalorder %s183, %s185
      %p192 = scmp.eq.s32.totalorder %s28, 1
      %p193 = por %p191, %p192
      %p194 = scmp.ne.s32.totalorder %s185, %s186
      %p195 = scmp.eq.s32.totalorder %s28, 0
      %p196 = por %p194, %p195
      %p197 = scmp.ne.s32.totalorder %s185, %s186
      %p198 = scmp.eq.s32.totalorder %s29, 1
      %p199 = por %p197, %p198
      %p201 = scmp.ne.s32.totalorder %s186, %s200
      %p202 = scmp.eq.s32.totalorder %s29, 0
      %p203 = por %p201, %p202
      %s205 = sadd.s32 %s204, 1
      %p208 = scmp.eq.s32.totalorder %s23, 1
      %p209 = scmp.ne.s32.totalorder %s204, %s206
      %p210 = scmp.eq.s32.totalorder %s23, 0
      %p211 = por %p209, %p210
      %p212 = scmp.ne.s32.totalorder %s204, %s206
      %p213 = scmp.eq.s32.totalorder %s28, 1
      %p214 = por %p212, %p213
      %p215 = scmp.ne.s32.totalorder %s206, %s207
      %p216 = scmp.eq.s32.totalorder %s28, 0
      %p217 = por %p215, %p216
      %p218 = scmp.ne.s32.totalorder %s206, %s207
      %p219 = scmp.eq.s32.totalorder %s29, 1
      %p220 = por %p218, %p219
      %p222 = scmp.ne.s32.totalorder %s207, %s221
      %p223 = scmp.eq.s32.totalorder %s29, 0
      %p224 = por %p222, %p223
      %s225 = ssub.s32 %s23, %s30
      %p226 = scmp.eq.s32.totalorder %s225, 0
      %s228 = sadd.s32 %s227, 1
      %s229 = scalar_select %p226, %s227, %s228
      %p232 = pneg %p226
      %p233 = scmp.eq.s32.totalorder %s23, 1
      %p234 = por %p232, %p233
      %p235 = scmp.ne.s32.totalorder %s227, %s230
      %p236 = scmp.eq.s32.totalorder %s23, 0
      %p237 = por %p235, %p236
      %p238 = scmp.ne.s32.totalorder %s227, %s230
      %p239 = scmp.eq.s32.totalorder %s28, 1
      %p240 = por %p238, %p239
      %p241 = scmp.ne.s32.totalorder %s230, %s231
      %p242 = scmp.eq.s32.totalorder %s28, 0
      %p243 = por %p241, %p242
      %p244 = scmp.ne.s32.totalorder %s230, %s231
      %p245 = scmp.eq.s32.totalorder %s29, 1
      %p246 = por %p244, %p245
      %p248 = scmp.ne.s32.totalorder %s231, %s247
      %p249 = scmp.eq.s32.totalorder %s29, 0
      %p250 = por %p248, %p249
      %p251 = scmp.le.s32.totalorder 1, %s23
      %p252 = scmp.lt.s32.totalorder %s23, 3
      %p253 = pnand %p251, %p252
      %p254 = pneg %p253
      // Predicated region
      $region9: #{tpu_custom_call.1} parent=5 // pred_check
        _
      $region10: #{tpu_custom_call.1} parent=5 // pred_check_branch
        %256 = sbr.rel (%p253) target = $region12
      $region11: #{tpu_custom_call.1} parent=5 // pred_region
        %s257 = ssub.s32 %s23, 1
        // Predicated region
        $region13: #{tpu_custom_call.1} parent=11 // pred_check
          %p258 = pneg %p70
        $region14: #{tpu_custom_call.1} parent=11 // pred_check_branch
          %260 = sbr.rel (%p258) target = $region16
        $region15: #{tpu_custom_call.1} parent=11 // pred_region
          %s262 = ssub.s32 2048, 2048
          %263 = vsyncadd [#allocation6], %s262
          %s264 = sshll.u32 [#allocation5], 4
          %s265 = int_to_ptr.vmem [resolvable:$true] %s264
          %270 = dma.hbm_to_vmem [thread:$0]  %s1, 2048, %s265, [#allocation6], 128, 128, 8
        $region16: #{tpu_custom_call.1} parent=11 // pred_fallthru
          _
        // Predicated region
        $region17: #{tpu_custom_call.1} parent=11 // pred_check
          %p271 = pneg %p91
        $region18: #{tpu_custom_call.1} parent=11 // pred_check_branch
          %273 = sbr.rel (%p271) target = $region20
        $region19: #{tpu_custom_call.1} parent=11 // pred_region
          _
        $region20: #{tpu_custom_call.1} parent=11 // pred_fallthru
          _
        // Predicated region
        $region21: #{tpu_custom_call.1} parent=11 // pred_check
          %p274 = pneg %p112
        $region22: #{tpu_custom_call.1} parent=11 // pred_check_branch
          %276 = sbr.rel (%p274) target = $region24
        $region23: #{tpu_custom_call.1} parent=11 // pred_region
          %s278 = ssub.s32 12288, 12288
          %279 = vsyncadd [#allocation6], %s278
          %s280 = sshll.u32 [#allocation7], 4
          %s281 = int_to_ptr.vmem [resolvable:$true] %s280
          %286 = dma.hbm_to_vmem [thread:$0]  %s3, 12288, %s281, [#allocation6], 128, 128, 8
        $region24: #{tpu_custom_call.1} parent=11 // pred_fallthru
          _
        // Predicated region
        $region25: #{tpu_custom_call.1} parent=11 // pred_check
          %p287 = pneg %p133
        $region26: #{tpu_custom_call.1} parent=11 // pred_check_branch
          %289 = sbr.rel (%p287) target = $region28
        $region27: #{tpu_custom_call.1} parent=11 // pred_region
          _
        $region28: #{tpu_custom_call.1} parent=11 // pred_fallthru
          _
        // Predicated region
        $region29: #{tpu_custom_call.1} parent=11 // pred_check
          %p290 = pneg %p154
        $region30: #{tpu_custom_call.1} parent=11 // pred_check_branch
          %292 = sbr.rel (%p290) target = $region32
        $region31: #{tpu_custom_call.1} parent=11 // pred_region
          %s294 = ssub.s32 4096, 4096
          %295 = vsyncadd [#allocation9], %s294
          %s296 = sshll.u32 [#allocation8], 4
          %s297 = int_to_ptr.vmem [resolvable:$true] %s296
          %302 = dma.hbm_to_vmem [thread:$0]  %s5, 4096, %s297, [#allocation9], 128, 128, 8
        $region32: #{tpu_custom_call.1} parent=11 // pred_fallthru
          _
        // Predicated region
        $region33: #{tpu_custom_call.1} parent=11 // pred_check
          %p303 = pneg %p175
        $region34: #{tpu_custom_call.1} parent=11 // pred_check_branch
          %305 = sbr.rel (%p303) target = $region36
        $region35: #{tpu_custom_call.1} parent=11 // pred_region
          _
        $region36: #{tpu_custom_call.1} parent=11 // pred_fallthru
          _
        // Predicated region
        $region37: #{tpu_custom_call.1} parent=11 // pred_check
          %p306 = pneg %p196
        $region38: #{tpu_custom_call.1} parent=11 // pred_check_branch
          %308 = sbr.rel (%p306) target = $region40
        $region39: #{tpu_custom_call.1} parent=11 // pred_region
          %s310 = ssub.s32 2048, 2048
          %311 = vsyncadd [#allocation9], %s310
          %s312 = sshll.u32 [#allocation10], 4
          %s313 = int_to_ptr.vmem [resolvable:$true] %s312
          %318 = dma.hbm_to_vmem [thread:$0]  %s7, 2048, %s313, [#allocation9], 128, 128, 8
        $region40: #{tpu_custom_call.1} parent=11 // pred_fallthru
          _
        // Predicated region
        $region41: #{tpu_custom_call.1} parent=11 // pred_check
          %p319 = pneg %p217
        $region42: #{tpu_custom_call.1} parent=11 // pred_check_branch
          %321 = sbr.rel (%p319) target = $region44
        $region43: #{tpu_custom_call.1} parent=11 // pred_region
          _
        $region44: #{tpu_custom_call.1} parent=11 // pred_fallthru
          _
      $region12: #{tpu_custom_call.1} parent=5 // pred_fallthru
        _
      %p322 = scmp.lt.s32.totalorder %s23, 2
      // Predicated region
      $region45: #{tpu_custom_call.1} parent=5 // pred_check
        %p323 = pneg %p322
      $region46: #{tpu_custom_call.1} parent=5 // pred_check_branch
        %325 = sbr.rel (%p323) target = $region48
      $region47: #{tpu_custom_call.1} parent=5 // pred_region
        // Predicated region
        $region49: #{tpu_custom_call.1} parent=47 // pred_check
          %p326 = pneg %p43
        $region50: #{tpu_custom_call.1} parent=47 // pred_check_branch
          %328 = sbr.rel (%p326) target = $region52
        $region51: #{tpu_custom_call.1} parent=47 // pred_region
          %s329 = sand.u32 %s33, 1
          %s330 = scalar_lea.sflag [#allocation3], %s329
          %s331 = sand.u32 %s33, 1
          %s332 = smul.addr %s331, 32
          %s333 = scalar_lea.vmem [#allocation2], %s332
          %s335 = ssub.s32 512, 512
          %336 = vsyncadd %s330, %s335
          %s337 = smul.addr %s23, 8
          %s338 = smul.addr %s337, 64
          %s339 = scalar_lea.hbm %s0, %s338
          %s340 = sshll.u32 %s333, 4
          %s341 = int_to_ptr.vmem [resolvable:$true] %s340
          %346 = dma.hbm_to_vmem [thread:$0]  %s339, 512, %s341, %s330, 64, 64, 4
        $region52: #{tpu_custom_call.1} parent=47 // pred_fallthru
          _
      $region48: #{tpu_custom_call.1} parent=5 // pred_fallthru
        _
      %p347 = scmp.le.s32.totalorder 1, %s23
      %p348 = scmp.lt.s32.totalorder %s23, 3
      %p349 = pnand %p347, %p348
      %p350 = pneg %p349
      // Predicated region
      $region53: #{tpu_custom_call.1} parent=5 // pred_check
        _
      $region54: #{tpu_custom_call.1} parent=5 // pred_check_branch
        %352 = sbr.rel (%p349) target = $region56
      $region55: #{tpu_custom_call.1} parent=5 // pred_region
        %s353 = ssub.s32 %s23, 1
        %s354 = sand.u32 %s36, 1
        %s355 = scalar_lea.sflag [#allocation3], %s354
        %s356 = sand.u32 %s36, 1
        %s357 = smul.addr %s356, 32
        %s358 = scalar_lea.vmem [#allocation2], %s357
        // Predicated region
        $region57: #{tpu_custom_call.1} parent=55 // pred_check
          %p359 = pneg %p49
        $region58: #{tpu_custom_call.1} parent=55 // pred_check_branch
          %361 = sbr.rel (%p359) target = $region60
        $region59: #{tpu_custom_call.1} parent=55 // pred_region
          %362 = dma.done %s355, 512
        $region60: #{tpu_custom_call.1} parent=55 // pred_fallthru
          _
        // Predicated region
        $region61: #{tpu_custom_call.1} parent=55 // pred_check
          %p363 = pneg %p70
        $region62: #{tpu_custom_call.1} parent=55 // pred_check_branch
          %365 = sbr.rel (%p363) target = $region64
        $region63: #{tpu_custom_call.1} parent=55 // pred_region
          %366 = dma.done [#allocation6], 2048
        $region64: #{tpu_custom_call.1} parent=55 // pred_fallthru
          _
        // Predicated region
        $region65: #{tpu_custom_call.1} parent=55 // pred_check
          %p367 = pneg %p112
        $region66: #{tpu_custom_call.1} parent=55 // pred_check_branch
          %369 = sbr.rel (%p367) target = $region68
        $region67: #{tpu_custom_call.1} parent=55 // pred_region
          %370 = dma.done [#allocation6], 12288
        $region68: #{tpu_custom_call.1} parent=55 // pred_fallthru
          _
        // Predicated region
        $region69: #{tpu_custom_call.1} parent=55 // pred_check
          %p371 = pneg %p154
        $region70: #{tpu_custom_call.1} parent=55 // pred_check_branch
          %373 = sbr.rel (%p371) target = $region72
        $region71: #{tpu_custom_call.1} parent=55 // pred_region
          %374 = dma.done [#allocation9], 4096
        $region72: #{tpu_custom_call.1} parent=55 // pred_fallthru
          _
        // Predicated region
        $region73: #{tpu_custom_call.1} parent=55 // pred_check
          %p375 = pneg %p196
        $region74: #{tpu_custom_call.1} parent=55 // pred_check_branch
          %377 = sbr.rel (%p375) target = $region76
        $region75: #{tpu_custom_call.1} parent=55 // pred_region
          %378 = dma.done [#allocation9], 2048
        $region76: #{tpu_custom_call.1} parent=55 // pred_fallthru
          _
        %s379 = sand.u32 %s36, 1
        %s380 = scalar_lea.sflag [#allocation3], %s379
        %s381 = sand.u32 %s36, 1
        %s382 = smul.addr %s381, 32
        %s383 = scalar_lea.vmem [#allocation2], %s382
        %p384 = pneg %p49
        %p385 = pneg %p46
        %p386 = pneg %p70
        %p387 = pneg %p67
        %p388 = pneg %p91
        %p389 = pneg %p88
        %p390 = pneg %p112
        %p391 = pneg %p109
        %p392 = pneg %p133
        %p393 = pneg %p130
        %p394 = pneg %p154
        %p395 = pneg %p151
        %p396 = pneg %p175
        %p397 = pneg %p172
        %p398 = pneg %p196
        %p399 = pneg %p193
        %p400 = pneg %p217
        %p401 = pneg %p214
        %p402 = pneg %p243
        %p403 = pneg %p240
        %s404 = sand.u32 %s230, 1
        %s405 = scalar_lea.sflag [#allocation4], %s404
        %s406 = sand.u32 %s230, 1
        %s407 = smul.addr %s406, 64
        %s408 = scalar_lea.vmem [#allocation11], %s407
        %v410 = vld [vmem:[%s358] sm:$0xf]
        %v411 = vld [vmem:[%s358 + $0x4] sm:$0xf]
        %v412 = vld [vmem:[%s358 + $0x8] sm:$0xf]
        %v413 = vld [vmem:[%s358 + $0xc] sm:$0xf]
        %v414 = vld [vmem:[%s358 + $0x10] sm:$0xf]
        %v415 = vld [vmem:[%s358 + $0x14] sm:$0xf]
        %v416 = vld [vmem:[%s358 + $0x18] sm:$0xf]
        %v417 = vld [vmem:[%s358 + $0x1c] sm:$0xf]
        %v418 = vlaneseq
        %v419 = vshrl.u32 %v418, 7
        %v420 = vadd.s32 %v419, 8
        %v421 = vadd.s32 %v419, 16
        %v422 = vadd.s32 %v419, 24
        %v423 = vadd.s32 %v419, 32
        %v424 = vadd.s32 %v419, 40
        %v425 = vadd.s32 %v419, 48
        %v426 = vadd.s32 %v419, 56
        %v427 = vld [vmem:[#allocation5] sm:$0xff]
        %v428 = vld [vmem:[#allocation5 + $0x8] sm:$0xff]
        %v429 = vld [vmem:[#allocation5 + $0x10] sm:$0xff]
        %v430 = vld [vmem:[#allocation5 + $0x18] sm:$0xff]
        %v431 = vld [vmem:[#allocation5 + $0x20] sm:$0xff]
        %v432 = vld [vmem:[#allocation5 + $0x28] sm:$0xff]
        %v433 = vld [vmem:[#allocation5 + $0x30] sm:$0xff]
        %v434 = vld [vmem:[#allocation5 + $0x38] sm:$0xff]
        %v435 = vld [vmem:[#allocation5 + $0x40] sm:$0xff]
        %v436 = vld [vmem:[#allocation5 + $0x48] sm:$0xff]
        %v437 = vld [vmem:[#allocation5 + $0x50] sm:$0xff]
        %v438 = vld [vmem:[#allocation5 + $0x58] sm:$0xff]
        %v439 = vld [vmem:[#allocation5 + $0x60] sm:$0xff]
        %v440 = vld [vmem:[#allocation5 + $0x68] sm:$0xff]
        %v441 = vld [vmem:[#allocation5 + $0x70] sm:$0xff]
        %v442 = vld [vmem:[#allocation5 + $0x78] sm:$0xff]
        %v443 = vld [vmem:[%s2] sm:$0x3]
        %v445 = vlaneseq
        %v446 = vshrl.u32 %v445, 7
        %v447 = vsub.s32 0, %v446
        %v448 = vrot.slane %v443, %v447
        %v449 = vlaneseq
        %v450 = vshrl.u32 %v449, 7
        %v451 = vsub.s32 1, %v450
        %v452 = vrot.slane %v443, %v451
        %v463 = vunpack.c.l.b16 %v410
        %v464 = vunpack.c.l.b16 %v411
        %v465 = vunpack.c.l.b16 %v412
        %v466 = vunpack.c.l.b16 %v413
        %v467 = vunpack.c.l.b16 %v414
        %v468 = vunpack.c.l.b16 %v415
        %v469 = vunpack.c.l.b16 %v416
        %v470 = vunpack.c.l.b16 %v417
        %v471 = vpack.c.b16 %v464, %v463
        %v472 = vpack.c.b16 %v466, %v465
        %v473 = vpack.c.b16 %v468, %v467
        %v474 = vpack.c.b16 %v470, %v469
        %v495 = vunpack.c.l.b16 %v427
        %v496 = vunpack.c.h.b16 %v427
        %v497 = vunpack.c.l.b16 %v428
        %v498 = vunpack.c.h.b16 %v428
        %v499 = vunpack.c.l.b16 %v429
        %v500 = vunpack.c.h.b16 %v429
        %v501 = vunpack.c.l.b16 %v430
        %v502 = vunpack.c.h.b16 %v430
        %v503 = vunpack.c.l.b16 %v431
        %v504 = vunpack.c.h.b16 %v431
        %v505 = vunpack.c.l.b16 %v432
        %v506 = vunpack.c.h.b16 %v432
        %v507 = vunpack.c.l.b16 %v433
        %v508 = vunpack.c.h.b16 %v433
        %v509 = vunpack.c.l.b16 %v434
        %v510 = vunpack.c.h.b16 %v434
        %v511 = vunpack.c.l.b16 %v435
        %v512 = vunpack.c.h.b16 %v435
        %v513 = vunpack.c.l.b16 %v436
        %v514 = vunpack.c.h.b16 %v436
        %v515 = vunpack.c.l.b16 %v437
        %v516 = vunpack.c.h.b16 %v437
        %v517 = vunpack.c.l.b16 %v438
        %v518 = vunpack.c.h.b16 %v438
        %v519 = vunpack.c.l.b16 %v439
        %v520 = vunpack.c.h.b16 %v439
        %v521 = vunpack.c.l.b16 %v440
        %v522 = vunpack.c.h.b16 %v440
        %v523 = vunpack.c.l.b16 %v441
        %v524 = vunpack.c.h.b16 %v441
        %v525 = vunpack.c.l.b16 %v442
        %v526 = vunpack.c.h.b16 %v442
        %v527 = vpack.c.b16 %v497, %v495
        %v528 = vpack.c.b16 %v498, %v496
        %v529 = vpack.c.b16 %v501, %v499
        %v530 = vpack.c.b16 %v502, %v500
        %v531 = vpack.c.b16 %v505, %v503
        %v532 = vpack.c.b16 %v506, %v504
        %v533 = vpack.c.b16 %v509, %v507
        %v534 = vpack.c.b16 %v510, %v508
        %v535 = vpack.c.b16 %v513, %v511
        %v536 = vpack.c.b16 %v514, %v512
        %v537 = vpack.c.b16 %v517, %v515
        %v538 = vpack.c.b16 %v518, %v516
        %v539 = vpack.c.b16 %v521, %v519
        %v540 = vpack.c.b16 %v522, %v520
        %v541 = vpack.c.b16 %v525, %v523
        %v542 = vpack.c.b16 %v526, %v524
        %559 = vmatprep.subr.bf16.mxu0 %v542
        %560 = vmatpush1.bf16.msra.mxu0 %v541
        %561 = vmatprep.subr.bf16.mxu0 %v540
        %562 = vmatpush1.bf16.msra.mxu0 %v539
        %563 = vmatprep.subr.bf16.mxu0 %v538
        %564 = vmatpush1.bf16.msra.mxu0 %v537
        %565 = vmatprep.subr.bf16.mxu0 %v536
        %566 = vmatpush1.bf16.msra.mxu0 %v535
        %567 = vmatprep.subr.bf16.mxu0 %v534
        %568 = vmatpush1.bf16.msra.mxu0 %v533
        %569 = vmatprep.subr.bf16.mxu0 %v532
        %570 = vmatpush1.bf16.msra.mxu0 %v531
        %571 = vmatprep.subr.bf16.mxu0 %v530
        %572 = vmatpush1.bf16.msra.mxu0 %v529
        %573 = vmatprep.subr.bf16.mxu0 %v528
        %574 = vmatpush1.bf16.msra.mxu0 %v527
        %575 = vmatprep.subr.bf16.mxu0 0
        %576 = vmatpush2.bf16.msra.mxu0 0
        %577 = vmatprep.subr.bf16.mxu0 0
        %578 = vmatpush2.bf16.msra.mxu0 0
        %579 = vmatprep.subr.bf16.mxu0 0
        %580 = vmatpush2.bf16.msra.mxu0 0
        %581 = vmatprep.subr.bf16.mxu0 0
        %582 = vmatpush2.bf16.msra.mxu0 0
        %583 = vmatprep.subr.bf16.mxu0 0
        %584 = vmatpush2.bf16.msra.mxu0 0
        %585 = vmatprep.subr.bf16.mxu0 0
        %586 = vmatpush2.bf16.msra.mxu0 0
        %587 = vmatprep.subr.bf16.mxu0 0
        %588 = vmatpush2.bf16.msra.mxu0 0
        %589 = vmatprep.subr.bf16.mxu0 0
        %590 = vmatpush2.bf16.msra.mxu0 0
        %591 = vmatprep.mubr.bf16.mxu0 0
        %592 = vmatmul.mubr.bf16.gmra.mxu0 %v471
        %v593 = vpop.f32.mrf.mxu0
        %v594 = vadd.f32 %v448, %v593
        %v595 = vpop.f32.mrf.mxu0
        %v596 = vadd.f32 %v452, %v595
        %v597 = vpop.f32.mrf.mxu0
        %v598 = vadd.f32 %v448, %v597
        %v599 = vpop.f32.mrf.mxu0
        %v600 = vadd.f32 %v452, %v599
        %601 = vmatprep.mubr.bf16.mxu0 0
        %602 = vmatmul.mubr.bf16.gmra.mxu0 %v472
        %v603 = vpop.f32.mrf.mxu0
        %v604 = vadd.f32 %v448, %v603
        %v605 = vpop.f32.mrf.mxu0
        %v606 = vadd.f32 %v452, %v605
        %v607 = vpop.f32.mrf.mxu0
        %v608 = vadd.f32 %v448, %v607
        %v609 = vpop.f32.mrf.mxu0
        %v610 = vadd.f32 %v452, %v609
        %611 = vmatprep.mubr.bf16.mxu0 0
        %612 = vmatmul.mubr.bf16.gmra.mxu0 %v473
        %v613 = vpop.f32.mrf.mxu0
        %v614 = vadd.f32 %v448, %v613
        %v615 = vpop.f32.mrf.mxu0
        %v616 = vadd.f32 %v452, %v615
        %v617 = vpop.f32.mrf.mxu0
        %v618 = vadd.f32 %v448, %v617
        %v619 = vpop.f32.mrf.mxu0
        %v620 = vadd.f32 %v452, %v619
        %621 = vmatprep.mubr.bf16.mxu0 0
        %622 = vmatmul.mubr.bf16.gmra.mxu0 %v474
        %v623 = vpop.f32.mrf.mxu0
        %v624 = vadd.f32 %v448, %v623
        %v625 = vpop.f32.mrf.mxu0
        %v626 = vadd.f32 %v452, %v625
        %v627 = vpop.f32.mrf.mxu0
        %v628 = vadd.f32 %v448, %v627
        %v629 = vpop.f32.mrf.mxu0
        %v630 = vadd.f32 %v452, %v629
        %631 = vdwg.mxu0
        %v632 = vmax.f32 %v594, 0.0
        %v633 = vmax.f32 %v596, 0.0
        %v634 = vmax.f32 %v598, 0.0
        %v635 = vmax.f32 %v600, 0.0
        %v636 = vmax.f32 %v604, 0.0
        %v637 = vmax.f32 %v606, 0.0
        %v638 = vmax.f32 %v608, 0.0
        %v639 = vmax.f32 %v610, 0.0
        %v640 = vmax.f32 %v614, 0.0
        %v641 = vmax.f32 %v616, 0.0
        %v642 = vmax.f32 %v618, 0.0
        %v643 = vmax.f32 %v620, 0.0
        %v644 = vmax.f32 %v624, 0.0
        %v645 = vmax.f32 %v626, 0.0
        %v646 = vmax.f32 %v628, 0.0
        %v647 = vmax.f32 %v630, 0.0
        %vm648 = vcmp.lt.s32.totalorder %v419, 64
        %vm649 = vcmp.lt.s32.totalorder %v420, 64
        %vm650 = vcmp.lt.s32.totalorder %v421, 64
        %vm651 = vcmp.lt.s32.totalorder %v422, 64
        %vm652 = vcmp.lt.s32.totalorder %v423, 64
        %vm653 = vcmp.lt.s32.totalorder %v424, 64
        %vm654 = vcmp.lt.s32.totalorder %v425, 64
        %vm655 = vcmp.lt.s32.totalorder %v426, 64
        %v656 = vsel %vm648, %v632, 0.0
        %v657 = vsel %vm648, %v633, 0.0
        %v658 = vsel %vm649, %v634, 0.0
        %v659 = vsel %vm649, %v635, 0.0
        %v660 = vsel %vm650, %v636, 0.0
        %v661 = vsel %vm650, %v637, 0.0
        %v662 = vsel %vm651, %v638, 0.0
        %v663 = vsel %vm651, %v639, 0.0
        %v664 = vsel %vm652, %v640, 0.0
        %v665 = vsel %vm652, %v641, 0.0
        %v666 = vsel %vm653, %v642, 0.0
        %v667 = vsel %vm653, %v643, 0.0
        %v668 = vsel %vm654, %v644, 0.0
        %v669 = vsel %vm654, %v645, 0.0
        %v670 = vsel %vm655, %v646, 0.0
        %v671 = vsel %vm655, %v647, 0.0
        %v672 = vrot.slane %v656, 7
        %v673 = vrot.slane %v657, 7
        %v674 = vrot.slane %v658, 7
        %v675 = vrot.slane %v659, 7
        %v676 = vrot.slane %v660, 7
        %v677 = vrot.slane %v661, 7
        %v678 = vrot.slane %v662, 7
        %v679 = vrot.slane %v663, 7
        %v680 = vrot.slane %v664, 7
        %v681 = vrot.slane %v665, 7
        %v682 = vrot.slane %v666, 7
        %v683 = vrot.slane %v667, 7
        %v684 = vrot.slane %v668, 7
        %v685 = vrot.slane %v669, 7
        %v686 = vrot.slane %v670, 7
        %v687 = vrot.slane %v671, 7
        %vm688 = vcmp.lt.s32.totalorder %v419, 1
        %v689 = vsel %vm688, %v684, %v686
        %v690 = vsel %vm688, %v685, %v687
        %v691 = vsel %vm688, %v682, %v684
        %v692 = vsel %vm688, %v683, %v685
        %v693 = vsel %vm688, %v680, %v682
        %v694 = vsel %vm688, %v681, %v683
        %v695 = vsel %vm688, %v678, %v680
        %v696 = vsel %vm688, %v679, %v681
        %v697 = vsel %vm688, %v676, %v678
        %v698 = vsel %vm688, %v677, %v679
        %v699 = vsel %vm688, %v674, %v676
        %v700 = vsel %vm688, %v675, %v677
        %v701 = vsel %vm688, %v672, %v674
        %v702 = vsel %vm688, %v673, %v675
        %v703 = vsel %vm688, %v686, %v672
        %v704 = vsel %vm688, %v687, %v673
        %vm705 = vcmp.lt.s32.totalorder %v420, 1
        %vm706 = vcmp.lt.s32.totalorder %v421, 1
        %vm707 = vcmp.lt.s32.totalorder %v422, 1
        %vm708 = vcmp.lt.s32.totalorder %v423, 1
        %vm709 = vcmp.lt.s32.totalorder %v424, 1
        %vm710 = vcmp.lt.s32.totalorder %v425, 1
        %vm711 = vcmp.lt.s32.totalorder %v426, 1
        %v712 = vsel %vm688, 0.0, %v703
        %v713 = vsel %vm688, 0.0, %v704
        %v714 = vsel %vm705, 0.0, %v701
        %v715 = vsel %vm705, 0.0, %v702
        %v716 = vsel %vm706, 0.0, %v699
        %v717 = vsel %vm706, 0.0, %v700
        %v718 = vsel %vm707, 0.0, %v697
        %v719 = vsel %vm707, 0.0, %v698
        %v720 = vsel %vm708, 0.0, %v695
        %v721 = vsel %vm708, 0.0, %v696
        %v722 = vsel %vm709, 0.0, %v693
        %v723 = vsel %vm709, 0.0, %v694
        %v724 = vsel %vm710, 0.0, %v691
        %v725 = vsel %vm710, 0.0, %v692
        %v726 = vsel %vm711, 0.0, %v689
        %v727 = vsel %vm711, 0.0, %v690
        %v728 = vpack.c.bf16 %v714, %v712
        %v729 = vpack.c.bf16 %v715, %v713
        %v730 = vpack.c.bf16 %v718, %v716
        %v731 = vpack.c.bf16 %v719, %v717
        %v732 = vpack.c.bf16 %v722, %v720
        %v733 = vpack.c.bf16 %v723, %v721
        %v734 = vpack.c.bf16 %v726, %v724
        %v735 = vpack.c.bf16 %v727, %v725
        %v736 = vld [vmem:[#allocation7] sm:$0xff]
        %v737 = vld [vmem:[#allocation7 + $0x8] sm:$0xff]
        %v738 = vld [vmem:[#allocation7 + $0x10] sm:$0xff]
        %v739 = vld [vmem:[#allocation7 + $0x18] sm:$0xff]
        %v740 = vld [vmem:[#allocation7 + $0x20] sm:$0xff]
        %v741 = vld [vmem:[#allocation7 + $0x28] sm:$0xff]
        %v742 = vld [vmem:[#allocation7 + $0x30] sm:$0xff]
        %v743 = vld [vmem:[#allocation7 + $0x38] sm:$0xff]
        %v744 = vld [vmem:[#allocation7 + $0x40] sm:$0xff]
        %v745 = vld [vmem:[#allocation7 + $0x48] sm:$0xff]
        %v746 = vld [vmem:[#allocation7 + $0x50] sm:$0xff]
        %v747 = vld [vmem:[#allocation7 + $0x58] sm:$0xff]
        %v748 = vld [vmem:[#allocation7 + $0x60] sm:$0xff]
        %v749 = vld [vmem:[#allocation7 + $0x68] sm:$0xff]
        %v750 = vld [vmem:[#allocation7 + $0x70] sm:$0xff]
        %v751 = vld [vmem:[#allocation7 + $0x78] sm:$0xff]
        %v752 = vld [vmem:[#allocation7 + $0x80] sm:$0xff]
        %v753 = vld [vmem:[#allocation7 + $0x88] sm:$0xff]
        %v754 = vld [vmem:[#allocation7 + $0x90] sm:$0xff]
        %v755 = vld [vmem:[#allocation7 + $0x98] sm:$0xff]
        %v756 = vld [vmem:[#allocation7 + $0xa0] sm:$0xff]
        %v757 = vld [vmem:[#allocation7 + $0xa8] sm:$0xff]
        %v758 = vld [vmem:[#allocation7 + $0xb0] sm:$0xff]
        %v759 = vld [vmem:[#allocation7 + $0xb8] sm:$0xff]
        %v760 = vld [vmem:[#allocation7 + $0xc0] sm:$0xff]
        %v761 = vld [vmem:[#allocation7 + $0xc8] sm:$0xff]
        %v762 = vld [vmem:[#allocation7 + $0xd0] sm:$0xff]
        %v763 = vld [vmem:[#allocation7 + $0xd8] sm:$0xff]
        %v764 = vld [vmem:[#allocation7 + $0xe0] sm:$0xff]
        %v765 = vld [vmem:[#allocation7 + $0xe8] sm:$0xff]
        %v766 = vld [vmem:[#allocation7 + $0xf0] sm:$0xff]
        %v767 = vld [vmem:[#allocation7 + $0xf8] sm:$0xff]
        %v768 = vpack.c.bf16 %v658, %v656
        %v769 = vpack.c.bf16 %v659, %v657
        %v770 = vpack.c.bf16 %v662, %v660
        %v771 = vpack.c.bf16 %v663, %v661
        %v772 = vpack.c.bf16 %v666, %v664
        %v773 = vpack.c.bf16 %v667, %v665
        %v774 = vpack.c.bf16 %v670, %v668
        %v775 = vpack.c.bf16 %v671, %v669
        %s776 = scalar_lea.vmem [#allocation7], 256
        %v777 = vld [vmem:[%s776] sm:$0xff]
        %v778 = vld [vmem:[%s776 + $0x8] sm:$0xff]
        %v779 = vld [vmem:[%s776 + $0x10] sm:$0xff]
        %v780 = vld [vmem:[%s776 + $0x18] sm:$0xff]
        %v781 = vld [vmem:[%s776 + $0x20] sm:$0xff]
        %v782 = vld [vmem:[%s776 + $0x28] sm:$0xff]
        %v783 = vld [vmem:[%s776 + $0x30] sm:$0xff]
        %v784 = vld [vmem:[%s776 + $0x38] sm:$0xff]
        %v785 = vld [vmem:[%s776 + $0x40] sm:$0xff]
        %v786 = vld [vmem:[%s776 + $0x48] sm:$0xff]
        %v787 = vld [vmem:[%s776 + $0x50] sm:$0xff]
        %v788 = vld [vmem:[%s776 + $0x58] sm:$0xff]
        %v789 = vld [vmem:[%s776 + $0x60] sm:$0xff]
        %v790 = vld [vmem:[%s776 + $0x68] sm:$0xff]
        %v791 = vld [vmem:[%s776 + $0x70] sm:$0xff]
        %v792 = vld [vmem:[%s776 + $0x78] sm:$0xff]
        %v793 = vld [vmem:[%s776 + $0x80] sm:$0xff]
        %v794 = vld [vmem:[%s776 + $0x88] sm:$0xff]
        %v795 = vld [vmem:[%s776 + $0x90] sm:$0xff]
        %v796 = vld [vmem:[%s776 + $0x98] sm:$0xff]
        %v797 = vld [vmem:[%s776 + $0xa0] sm:$0xff]
        %v798 = vld [vmem:[%s776 + $0xa8] sm:$0xff]
        %v799 = vld [vmem:[%s776 + $0xb0] sm:$0xff]
        %v800 = vld [vmem:[%s776 + $0xb8] sm:$0xff]
        %v801 = vld [vmem:[%s776 + $0xc0] sm:$0xff]
        %v802 = vld [vmem:[%s776 + $0xc8] sm:$0xff]
        %v803 = vld [vmem:[%s776 + $0xd0] sm:$0xff]
        %v804 = vld [vmem:[%s776 + $0xd8] sm:$0xff]
        %v805 = vld [vmem:[%s776 + $0xe0] sm:$0xff]
        %v806 = vld [vmem:[%s776 + $0xe8] sm:$0xff]
        %v807 = vld [vmem:[%s776 + $0xf0] sm:$0xff]
        %v808 = vld [vmem:[%s776 + $0xf8] sm:$0xff]
        %v841 = vunpack.c.l.b16 %v777
        %v842 = vunpack.c.h.b16 %v777
        %v843 = vunpack.c.l.b16 %v778
        %v844 = vunpack.c.h.b16 %v778
        %v845 = vunpack.c.l.b16 %v779
        %v846 = vunpack.c.h.b16 %v779
        %v847 = vunpack.c.l.b16 %v780
        %v848 = vunpack.c.h.b16 %v780
        %v849 = vunpack.c.l.b16 %v781
        %v850 = vunpack.c.h.b16 %v781
        %v851 = vunpack.c.l.b16 %v782
        %v852 = vunpack.c.h.b16 %v782
        %v853 = vunpack.c.l.b16 %v783
        %v854 = vunpack.c.h.b16 %v783
        %v855 = vunpack.c.l.b16 %v784
        %v856 = vunpack.c.h.b16 %v784
        %v857 = vunpack.c.l.b16 %v785
        %v858 = vunpack.c.h.b16 %v785
        %v859 = vunpack.c.l.b16 %v786
        %v860 = vunpack.c.h.b16 %v786
        %v861 = vunpack.c.l.b16 %v787
        %v862 = vunpack.c.h.b16 %v787
        %v863 = vunpack.c.l.b16 %v788
        %v864 = vunpack.c.h.b16 %v788
        %v865 = vunpack.c.l.b16 %v789
        %v866 = vunpack.c.h.b16 %v789
        %v867 = vunpack.c.l.b16 %v790
        %v868 = vunpack.c.h.b16 %v790
        %v869 = vunpack.c.l.b16 %v791
        %v870 = vunpack.c.h.b16 %v791
        %v871 = vunpack.c.l.b16 %v792
        %v872 = vunpack.c.h.b16 %v792
        %v873 = vunpack.c.l.b16 %v793
        %v874 = vunpack.c.h.b16 %v793
        %v875 = vunpack.c.l.b16 %v794
        %v876 = vunpack.c.h.b16 %v794
        %v877 = vunpack.c.l.b16 %v795
        %v878 = vunpack.c.h.b16 %v795
        %v879 = vunpack.c.l.b16 %v796
        %v880 = vunpack.c.h.b16 %v796
        %v881 = vunpack.c.l.b16 %v797
        %v882 = vunpack.c.h.b16 %v797
        %v883 = vunpack.c.l.b16 %v798
        %v884 = vunpack.c.h.b16 %v798
        %v885 = vunpack.c.l.b16 %v799
        %v886 = vunpack.c.h.b16 %v799
        %v887 = vunpack.c.l.b16 %v800
        %v888 = vunpack.c.h.b16 %v800
        %v889 = vunpack.c.l.b16 %v801
        %v890 = vunpack.c.h.b16 %v801
        %v891 = vunpack.c.l.b16 %v802
        %v892 = vunpack.c.h.b16 %v802
        %v893 = vunpack.c.l.b16 %v803
        %v894 = vunpack.c.h.b16 %v803
        %v895 = vunpack.c.l.b16 %v804
        %v896 = vunpack.c.h.b16 %v804
        %v897 = vunpack.c.l.b16 %v805
        %v898 = vunpack.c.h.b16 %v805
        %v899 = vunpack.c.l.b16 %v806
        %v900 = vunpack.c.h.b16 %v806
        %v901 = vunpack.c.l.b16 %v807
        %v902 = vunpack.c.h.b16 %v807
        %v903 = vunpack.c.l.b16 %v808
        %v904 = vunpack.c.h.b16 %v808
        %v905 = vpack.c.b16 %v843, %v841
        %v906 = vpack.c.b16 %v844, %v842
        %v907 = vpack.c.b16 %v847, %v845
        %v908 = vpack.c.b16 %v848, %v846
        %v909 = vpack.c.b16 %v851, %v849
        %v910 = vpack.c.b16 %v852, %v850
        %v911 = vpack.c.b16 %v855, %v853
        %v912 = vpack.c.b16 %v856, %v854
        %v913 = vpack.c.b16 %v859, %v857
        %v914 = vpack.c.b16 %v860, %v858
        %v915 = vpack.c.b16 %v863, %v861
        %v916 = vpack.c.b16 %v864, %v862
        %v917 = vpack.c.b16 %v867, %v865
        %v918 = vpack.c.b16 %v868, %v866
        %v919 = vpack.c.b16 %v871, %v869
        %v920 = vpack.c.b16 %v872, %v870
        %v921 = vpack.c.b16 %v875, %v873
        %v922 = vpack.c.b16 %v876, %v874
        %v923 = vpack.c.b16 %v879, %v877
        %v924 = vpack.c.b16 %v880, %v878
        %v925 = vpack.c.b16 %v883, %v881
        %v926 = vpack.c.b16 %v884, %v882
        %v927 = vpack.c.b16 %v887, %v885
        %v928 = vpack.c.b16 %v888, %v886
        %v929 = vpack.c.b16 %v891, %v889
        %v930 = vpack.c.b16 %v892, %v890
        %v931 = vpack.c.b16 %v895, %v893
        %v932 = vpack.c.b16 %v896, %v894
        %v933 = vpack.c.b16 %v899, %v897
        %v934 = vpack.c.b16 %v900, %v898
        %v935 = vpack.c.b16 %v903, %v901
        %v936 = vpack.c.b16 %v904, %v902
        %969 = vmatprep.subr.bf16.mxu0 %v920
        %970 = vmatpush1.bf16.msra.mxu0 %v919
        %971 = vmatprep.subr.bf16.mxu0 %v918
        %972 = vmatpush1.bf16.msra.mxu0 %v917
        %973 = vmatprep.subr.bf16.mxu0 %v916
        %974 = vmatpush1.bf16.msra.mxu0 %v915
        %975 = vmatprep.subr.bf16.mxu0 %v914
        %976 = vmatpush1.bf16.msra.mxu0 %v913
        %977 = vmatprep.subr.bf16.mxu0 %v912
        %978 = vmatpush1.bf16.msra.mxu0 %v911
        %979 = vmatprep.subr.bf16.mxu0 %v910
        %980 = vmatpush1.bf16.msra.mxu0 %v909
        %981 = vmatprep.subr.bf16.mxu0 %v908
        %982 = vmatpush1.bf16.msra.mxu0 %v907
        %983 = vmatprep.subr.bf16.mxu0 %v906
        %984 = vmatpush1.bf16.msra.mxu0 %v905
        %985 = vmatprep.subr.bf16.mxu0 %v936
        %986 = vmatpush2.bf16.msra.mxu0 %v935
        %987 = vmatprep.subr.bf16.mxu0 %v934
        %988 = vmatpush2.bf16.msra.mxu0 %v933
        %989 = vmatprep.subr.bf16.mxu0 %v932
        %990 = vmatpush2.bf16.msra.mxu0 %v931
        %991 = vmatprep.subr.bf16.mxu0 %v930
        %992 = vmatpush2.bf16.msra.mxu0 %v929
        %993 = vmatprep.subr.bf16.mxu0 %v928
        %994 = vmatpush2.bf16.msra.mxu0 %v927
        %995 = vmatprep.subr.bf16.mxu0 %v926
        %996 = vmatpush2.bf16.msra.mxu0 %v925
        %997 = vmatprep.subr.bf16.mxu0 %v924
        %998 = vmatpush2.bf16.msra.mxu0 %v923
        %999 = vmatprep.subr.bf16.mxu0 %v922
        %1000 = vmatpush2.bf16.msra.mxu0 %v921
        %1001 = vmatprep.mubr.bf16.mxu0 %v769
        %1002 = vmatmul.mubr.bf16.gmra.mxu0 %v768
        %v1003 = vpop.f32.mrf.mxu0
        %v1004 = vadd.f32 0.0, %v1003
        %v1005 = vpop.f32.mrf.mxu0
        %v1006 = vadd.f32 0.0, %v1005
        %v1007 = vpop.f32.mrf.mxu0
        %v1008 = vadd.f32 0.0, %v1007
        %v1009 = vpop.f32.mrf.mxu0
        %v1010 = vadd.f32 0.0, %v1009
        %1011 = vmatprep.mubr.bf16.mxu0 %v771
        %1012 = vmatmul.mubr.bf16.gmra.mxu0 %v770
        %v1013 = vpop.f32.mrf.mxu0
        %v1014 = vadd.f32 0.0, %v1013
        %v1015 = vpop.f32.mrf.mxu0
        %v1016 = vadd.f32 0.0, %v1015
        %v1017 = vpop.f32.mrf.mxu0
        %v1018 = vadd.f32 0.0, %v1017
        %v1019 = vpop.f32.mrf.mxu0
        %v1020 = vadd.f32 0.0, %v1019
        %1021 = vmatprep.mubr.bf16.mxu0 %v773
        %1022 = vmatmul.mubr.bf16.gmra.mxu0 %v772
        %v1023 = vpop.f32.mrf.mxu0
        %v1024 = vadd.f32 0.0, %v1023
        %v1025 = vpop.f32.mrf.mxu0
        %v1026 = vadd.f32 0.0, %v1025
        %v1027 = vpop.f32.mrf.mxu0
        %v1028 = vadd.f32 0.0, %v1027
        %v1029 = vpop.f32.mrf.mxu0
        %v1030 = vadd.f32 0.0, %v1029
        %1031 = vmatprep.mubr.bf16.mxu0 %v775
        %1032 = vmatmul.mubr.bf16.gmra.mxu0 %v774
        %v1033 = vpop.f32.mrf.mxu0
        %v1034 = vadd.f32 0.0, %v1033
        %v1035 = vpop.f32.mrf.mxu0
        %v1036 = vadd.f32 0.0, %v1035
        %v1037 = vpop.f32.mrf.mxu0
        %v1038 = vadd.f32 0.0, %v1037
        %v1039 = vpop.f32.mrf.mxu0
        %v1040 = vadd.f32 0.0, %v1039
        %1041 = vdwg.mxu0
        %v1074 = vunpack.c.l.b16 %v736
        %v1075 = vunpack.c.h.b16 %v736
        %v1076 = vunpack.c.l.b16 %v737
        %v1077 = vunpack.c.h.b16 %v737
        %v1078 = vunpack.c.l.b16 %v738
        %v1079 = vunpack.c.h.b16 %v738
        %v1080 = vunpack.c.l.b16 %v739
        %v1081 = vunpack.c.h.b16 %v739
        %v1082 = vunpack.c.l.b16 %v740
        %v1083 = vunpack.c.h.b16 %v740
        %v1084 = vunpack.c.l.b16 %v741
        %v1085 = vunpack.c.h.b16 %v741
        %v1086 = vunpack.c.l.b16 %v742
        %v1087 = vunpack.c.h.b16 %v742
        %v1088 = vunpack.c.l.b16 %v743
        %v1089 = vunpack.c.h.b16 %v743
        %v1090 = vunpack.c.l.b16 %v744
        %v1091 = vunpack.c.h.b16 %v744
        %v1092 = vunpack.c.l.b16 %v745
        %v1093 = vunpack.c.h.b16 %v745
        %v1094 = vunpack.c.l.b16 %v746
        %v1095 = vunpack.c.h.b16 %v746
        %v1096 = vunpack.c.l.b16 %v747
        %v1097 = vunpack.c.h.b16 %v747
        %v1098 = vunpack.c.l.b16 %v748
        %v1099 = vunpack.c.h.b16 %v748
        %v1100 = vunpack.c.l.b16 %v749
        %v1101 = vunpack.c.h.b16 %v749
        %v1102 = vunpack.c.l.b16 %v750
        %v1103 = vunpack.c.h.b16 %v750
        %v1104 = vunpack.c.l.b16 %v751
        %v1105 = vunpack.c.h.b16 %v751
        %v1106 = vunpack.c.l.b16 %v752
        %v1107 = vunpack.c.h.b16 %v752
        %v1108 = vunpack.c.l.b16 %v753
        %v1109 = vunpack.c.h.b16 %v753
        %v1110 = vunpack.c.l.b16 %v754
        %v1111 = vunpack.c.h.b16 %v754
        %v1112 = vunpack.c.l.b16 %v755
        %v1113 = vunpack.c.h.b16 %v755
        %v1114 = vunpack.c.l.b16 %v756
        %v1115 = vunpack.c.h.b16 %v756
        %v1116 = vunpack.c.l.b16 %v757
        %v1117 = vunpack.c.h.b16 %v757
        %v1118 = vunpack.c.l.b16 %v758
        %v1119 = vunpack.c.h.b16 %v758
        %v1120 = vunpack.c.l.b16 %v759
        %v1121 = vunpack.c.h.b16 %v759
        %v1122 = vunpack.c.l.b16 %v760
        %v1123 = vunpack.c.h.b16 %v760
        %v1124 = vunpack.c.l.b16 %v761
        %v1125 = vunpack.c.h.b16 %v761
        %v1126 = vunpack.c.l.b16 %v762
        %v1127 = vunpack.c.h.b16 %v762
        %v1128 = vunpack.c.l.b16 %v763
        %v1129 = vunpack.c.h.b16 %v763
        %v1130 = vunpack.c.l.b16 %v764
        %v1131 = vunpack.c.h.b16 %v764
        %v1132 = vunpack.c.l.b16 %v765
        %v1133 = vunpack.c.h.b16 %v765
        %v1134 = vunpack.c.l.b16 %v766
        %v1135 = vunpack.c.h.b16 %v766
        %v1136 = vunpack.c.l.b16 %v767
        %v1137 = vunpack.c.h.b16 %v767
        %v1138 = vpack.c.b16 %v1076, %v1074
        %v1139 = vpack.c.b16 %v1077, %v1075
        %v1140 = vpack.c.b16 %v1080, %v1078
        %v1141 = vpack.c.b16 %v1081, %v1079
        %v1142 = vpack.c.b16 %v1084, %v1082
        %v1143 = vpack.c.b16 %v1085, %v1083
        %v1144 = vpack.c.b16 %v1088, %v1086
        %v1145 = vpack.c.b16 %v1089, %v1087
        %v1146 = vpack.c.b16 %v1092, %v1090
        %v1147 = vpack.c.b16 %v1093, %v1091
        %v1148 = vpack.c.b16 %v1096, %v1094
        %v1149 = vpack.c.b16 %v1097, %v1095
        %v1150 = vpack.c.b16 %v1100, %v1098
        %v1151 = vpack.c.b16 %v1101, %v1099
        %v1152 = vpack.c.b16 %v1104, %v1102
        %v1153 = vpack.c.b16 %v1105, %v1103
        %v1154 = vpack.c.b16 %v1108, %v1106
        %v1155 = vpack.c.b16 %v1109, %v1107
        %v1156 = vpack.c.b16 %v1112, %v1110
        %v1157 = vpack.c.b16 %v1113, %v1111
        %v1158 = vpack.c.b16 %v1116, %v1114
        %v1159 = vpack.c.b16 %v1117, %v1115
        %v1160 = vpack.c.b16 %v1120, %v1118
        %v1161 = vpack.c.b16 %v1121, %v1119
        %v1162 = vpack.c.b16 %v1124, %v1122
        %v1163 = vpack.c.b16 %v1125, %v1123
        %v1164 = vpack.c.b16 %v1128, %v1126
        %v1165 = vpack.c.b16 %v1129, %v1127
        %v1166 = vpack.c.b16 %v1132, %v1130
        %v1167 = vpack.c.b16 %v1133, %v1131
        %v1168 = vpack.c.b16 %v1136, %v1134
        %v1169 = vpack.c.b16 %v1137, %v1135
        %1202 = vmatprep.subr.bf16.mxu0 %v1153
        %1203 = vmatpush1.bf16.msra.mxu0 %v1152
        %1204 = vmatprep.subr.bf16.mxu0 %v1151
        %1205 = vmatpush1.bf16.msra.mxu0 %v1150
        %1206 = vmatprep.subr.bf16.mxu0 %v1149
        %1207 = vmatpush1.bf16.msra.mxu0 %v1148
        %1208 = vmatprep.subr.bf16.mxu0 %v1147
        %1209 = vmatpush1.bf16.msra.mxu0 %v1146
        %1210 = vmatprep.subr.bf16.mxu0 %v1145
        %1211 = vmatpush1.bf16.msra.mxu0 %v1144
        %1212 = vmatprep.subr.bf16.mxu0 %v1143
        %1213 = vmatpush1.bf16.msra.mxu0 %v1142
        %1214 = vmatprep.subr.bf16.mxu0 %v1141
        %1215 = vmatpush1.bf16.msra.mxu0 %v1140
        %1216 = vmatprep.subr.bf16.mxu0 %v1139
        %1217 = vmatpush1.bf16.msra.mxu0 %v1138
        %1218 = vmatprep.subr.bf16.mxu0 %v1169
        %1219 = vmatpush2.bf16.msra.mxu0 %v1168
        %1220 = vmatprep.subr.bf16.mxu0 %v1167
        %1221 = vmatpush2.bf16.msra.mxu0 %v1166
        %1222 = vmatprep.subr.bf16.mxu0 %v1165
        %1223 = vmatpush2.bf16.msra.mxu0 %v1164
        %1224 = vmatprep.subr.bf16.mxu0 %v1163
        %1225 = vmatpush2.bf16.msra.mxu0 %v1162
        %1226 = vmatprep.subr.bf16.mxu0 %v1161
        %1227 = vmatpush2.bf16.msra.mxu0 %v1160
        %1228 = vmatprep.subr.bf16.mxu0 %v1159
        %1229 = vmatpush2.bf16.msra.mxu0 %v1158
        %1230 = vmatprep.subr.bf16.mxu0 %v1157
        %1231 = vmatpush2.bf16.msra.mxu0 %v1156
        %1232 = vmatprep.subr.bf16.mxu0 %v1155
        %1233 = vmatpush2.bf16.msra.mxu0 %v1154
        %1234 = vmatprep.mubr.bf16.mxu0 %v729
        %1235 = vmatmul.mubr.bf16.gmra.mxu0 %v728
        %v1236 = vpop.f32.mrf.mxu0
        %v1237 = vadd.f32 %v1004, %v1236
        %v1238 = vpop.f32.mrf.mxu0
        %v1239 = vadd.f32 %v1006, %v1238
        %v1240 = vpop.f32.mrf.mxu0
        %v1241 = vadd.f32 %v1008, %v1240
        %v1242 = vpop.f32.mrf.mxu0
        %v1243 = vadd.f32 %v1010, %v1242
        %1244 = vmatprep.mubr.bf16.mxu0 %v731
        %1245 = vmatmul.mubr.bf16.gmra.mxu0 %v730
        %v1246 = vpop.f32.mrf.mxu0
        %v1247 = vadd.f32 %v1014, %v1246
        %v1248 = vpop.f32.mrf.mxu0
        %v1249 = vadd.f32 %v1016, %v1248
        %v1250 = vpop.f32.mrf.mxu0
        %v1251 = vadd.f32 %v1018, %v1250
        %v1252 = vpop.f32.mrf.mxu0
        %v1253 = vadd.f32 %v1020, %v1252
        %1254 = vmatprep.mubr.bf16.mxu0 %v733
        %1255 = vmatmul.mubr.bf16.gmra.mxu0 %v732
        %v1256 = vpop.f32.mrf.mxu0
        %v1257 = vadd.f32 %v1024, %v1256
        %v1258 = vpop.f32.mrf.mxu0
        %v1259 = vadd.f32 %v1026, %v1258
        %v1260 = vpop.f32.mrf.mxu0
        %v1261 = vadd.f32 %v1028, %v1260
        %v1262 = vpop.f32.mrf.mxu0
        %v1263 = vadd.f32 %v1030, %v1262
        %1264 = vmatprep.mubr.bf16.mxu0 %v735
        %1265 = vmatmul.mubr.bf16.gmra.mxu0 %v734
        %v1266 = vpop.f32.mrf.mxu0
        %v1267 = vadd.f32 %v1034, %v1266
        %v1268 = vpop.f32.mrf.mxu0
        %v1269 = vadd.f32 %v1036, %v1268
        %v1270 = vpop.f32.mrf.mxu0
        %v1271 = vadd.f32 %v1038, %v1270
        %v1272 = vpop.f32.mrf.mxu0
        %v1273 = vadd.f32 %v1040, %v1272
        %1274 = vdwg.mxu0
        %v1275 = vrot.slane %v656, 1
        %v1276 = vrot.slane %v657, 1
        %v1277 = vrot.slane %v658, 1
        %v1278 = vrot.slane %v659, 1
        %v1279 = vrot.slane %v660, 1
        %v1280 = vrot.slane %v661, 1
        %v1281 = vrot.slane %v662, 1
        %v1282 = vrot.slane %v663, 1
        %v1283 = vrot.slane %v664, 1
        %v1284 = vrot.slane %v665, 1
        %v1285 = vrot.slane %v666, 1
        %v1286 = vrot.slane %v667, 1
        %v1287 = vrot.slane %v668, 1
        %v1288 = vrot.slane %v669, 1
        %v1289 = vrot.slane %v670, 1
        %v1290 = vrot.slane %v671, 1
        %vm1291 = vcmp.lt.s32.totalorder %v419, 7
        %v1292 = vsel %vm1291, %v1287, %v1289
        %v1293 = vsel %vm1291, %v1288, %v1290
        %v1294 = vsel %vm1291, %v1285, %v1287
        %v1295 = vsel %vm1291, %v1286, %v1288
        %v1296 = vsel %vm1291, %v1283, %v1285
        %v1297 = vsel %vm1291, %v1284, %v1286
        %v1298 = vsel %vm1291, %v1281, %v1283
        %v1299 = vsel %vm1291, %v1282, %v1284
        %v1300 = vsel %vm1291, %v1279, %v1281
        %v1301 = vsel %vm1291, %v1280, %v1282
        %v1302 = vsel %vm1291, %v1277, %v1279
        %v1303 = vsel %vm1291, %v1278, %v1280
        %v1304 = vsel %vm1291, %v1275, %v1277
        %v1305 = vsel %vm1291, %v1276, %v1278
        %v1306 = vsel %vm1291, %v1289, %v1275
        %v1307 = vsel %vm1291, %v1290, %v1276
        %vm1308 = vcmp.ge.s32.totalorder %v419, 63
        %vm1309 = vcmp.ge.s32.totalorder %v420, 63
        %vm1310 = vcmp.ge.s32.totalorder %v421, 63
        %vm1311 = vcmp.ge.s32.totalorder %v422, 63
        %vm1312 = vcmp.ge.s32.totalorder %v423, 63
        %vm1313 = vcmp.ge.s32.totalorder %v424, 63
        %vm1314 = vcmp.ge.s32.totalorder %v425, 63
        %vm1315 = vcmp.ge.s32.totalorder %v426, 63
        %v1316 = vsel %vm1308, 0.0, %v1304
        %v1317 = vsel %vm1308, 0.0, %v1305
        %v1318 = vsel %vm1309, 0.0, %v1302
        %v1319 = vsel %vm1309, 0.0, %v1303
        %v1320 = vsel %vm1310, 0.0, %v1300
        %v1321 = vsel %vm1310, 0.0, %v1301
        %v1322 = vsel %vm1311, 0.0, %v1298
        %v1323 = vsel %vm1311, 0.0, %v1299
        %v1324 = vsel %vm1312, 0.0, %v1296
        %v1325 = vsel %vm1312, 0.0, %v1297
        %v1326 = vsel %vm1313, 0.0, %v1294
        %v1327 = vsel %vm1313, 0.0, %v1295
        %v1328 = vsel %vm1314, 0.0, %v1292
        %v1329 = vsel %vm1314, 0.0, %v1293
        %v1330 = vsel %vm1315, 0.0, %v1306
        %v1331 = vsel %vm1315, 0.0, %v1307
        %v1332 = vpack.c.bf16 %v1318, %v1316
        %v1333 = vpack.c.bf16 %v1319, %v1317
        %v1334 = vpack.c.bf16 %v1322, %v1320
        %v1335 = vpack.c.bf16 %v1323, %v1321
        %v1336 = vpack.c.bf16 %v1326, %v1324
        %v1337 = vpack.c.bf16 %v1327, %v1325
        %v1338 = vpack.c.bf16 %v1330, %v1328
        %v1339 = vpack.c.bf16 %v1331, %v1329
        %s1340 = scalar_lea.vmem [#allocation7], 512
        %v1341 = vld [vmem:[%s1340] sm:$0xff]
        %v1342 = vld [vmem:[%s1340 + $0x8] sm:$0xff]
        %v1343 = vld [vmem:[%s1340 + $0x10] sm:$0xff]
        %v1344 = vld [vmem:[%s1340 + $0x18] sm:$0xff]
        %v1345 = vld [vmem:[%s1340 + $0x20] sm:$0xff]
        %v1346 = vld [vmem:[%s1340 + $0x28] sm:$0xff]
        %v1347 = vld [vmem:[%s1340 + $0x30] sm:$0xff]
        %v1348 = vld [vmem:[%s1340 + $0x38] sm:$0xff]
        %v1349 = vld [vmem:[%s1340 + $0x40] sm:$0xff]
        %v1350 = vld [vmem:[%s1340 + $0x48] sm:$0xff]
        %v1351 = vld [vmem:[%s1340 + $0x50] sm:$0xff]
        %v1352 = vld [vmem:[%s1340 + $0x58] sm:$0xff]
        %v1353 = vld [vmem:[%s1340 + $0x60] sm:$0xff]
        %v1354 = vld [vmem:[%s1340 + $0x68] sm:$0xff]
        %v1355 = vld [vmem:[%s1340 + $0x70] sm:$0xff]
        %v1356 = vld [vmem:[%s1340 + $0x78] sm:$0xff]
        %v1357 = vld [vmem:[%s1340 + $0x80] sm:$0xff]
        %v1358 = vld [vmem:[%s1340 + $0x88] sm:$0xff]
        %v1359 = vld [vmem:[%s1340 + $0x90] sm:$0xff]
        %v1360 = vld [vmem:[%s1340 + $0x98] sm:$0xff]
        %v1361 = vld [vmem:[%s1340 + $0xa0] sm:$0xff]
        %v1362 = vld [vmem:[%s1340 + $0xa8] sm:$0xff]
        %v1363 = vld [vmem:[%s1340 + $0xb0] sm:$0xff]
        %v1364 = vld [vmem:[%s1340 + $0xb8] sm:$0xff]
        %v1365 = vld [vmem:[%s1340 + $0xc0] sm:$0xff]
        %v1366 = vld [vmem:[%s1340 + $0xc8] sm:$0xff]
        %v1367 = vld [vmem:[%s1340 + $0xd0] sm:$0xff]
        %v1368 = vld [vmem:[%s1340 + $0xd8] sm:$0xff]
        %v1369 = vld [vmem:[%s1340 + $0xe0] sm:$0xff]
        %v1370 = vld [vmem:[%s1340 + $0xe8] sm:$0xff]
        %v1371 = vld [vmem:[%s1340 + $0xf0] sm:$0xff]
        %v1372 = vld [vmem:[%s1340 + $0xf8] sm:$0xff]
        %v1405 = vunpack.c.l.b16 %v1341
        %v1406 = vunpack.c.h.b16 %v1341
        %v1407 = vunpack.c.l.b16 %v1342
        %v1408 = vunpack.c.h.b16 %v1342
        %v1409 = vunpack.c.l.b16 %v1343
        %v1410 = vunpack.c.h.b16 %v1343
        %v1411 = vunpack.c.l.b16 %v1344
        %v1412 = vunpack.c.h.b16 %v1344
        %v1413 = vunpack.c.l.b16 %v1345
        %v1414 = vunpack.c.h.b16 %v1345
        %v1415 = vunpack.c.l.b16 %v1346
        %v1416 = vunpack.c.h.b16 %v1346
        %v1417 = vunpack.c.l.b16 %v1347
        %v1418 = vunpack.c.h.b16 %v1347
        %v1419 = vunpack.c.l.b16 %v1348
        %v1420 = vunpack.c.h.b16 %v1348
        %v1421 = vunpack.c.l.b16 %v1349
        %v1422 = vunpack.c.h.b16 %v1349
        %v1423 = vunpack.c.l.b16 %v1350
        %v1424 = vunpack.c.h.b16 %v1350
        %v1425 = vunpack.c.l.b16 %v1351
        %v1426 = vunpack.c.h.b16 %v1351
        %v1427 = vunpack.c.l.b16 %v1352
        %v1428 = vunpack.c.h.b16 %v1352
        %v1429 = vunpack.c.l.b16 %v1353
        %v1430 = vunpack.c.h.b16 %v1353
        %v1431 = vunpack.c.l.b16 %v1354
        %v1432 = vunpack.c.h.b16 %v1354
        %v1433 = vunpack.c.l.b16 %v1355
        %v1434 = vunpack.c.h.b16 %v1355
        %v1435 = vunpack.c.l.b16 %v1356
        %v1436 = vunpack.c.h.b16 %v1356
        %v1437 = vunpack.c.l.b16 %v1357
        %v1438 = vunpack.c.h.b16 %v1357
        %v1439 = vunpack.c.l.b16 %v1358
        %v1440 = vunpack.c.h.b16 %v1358
        %v1441 = vunpack.c.l.b16 %v1359
        %v1442 = vunpack.c.h.b16 %v1359
        %v1443 = vunpack.c.l.b16 %v1360
        %v1444 = vunpack.c.h.b16 %v1360
        %v1445 = vunpack.c.l.b16 %v1361
        %v1446 = vunpack.c.h.b16 %v1361
        %v1447 = vunpack.c.l.b16 %v1362
        %v1448 = vunpack.c.h.b16 %v1362
        %v1449 = vunpack.c.l.b16 %v1363
        %v1450 = vunpack.c.h.b16 %v1363
        %v1451 = vunpack.c.l.b16 %v1364
        %v1452 = vunpack.c.h.b16 %v1364
        %v1453 = vunpack.c.l.b16 %v1365
        %v1454 = vunpack.c.h.b16 %v1365
        %v1455 = vunpack.c.l.b16 %v1366
        %v1456 = vunpack.c.h.b16 %v1366
        %v1457 = vunpack.c.l.b16 %v1367
        %v1458 = vunpack.c.h.b16 %v1367
        %v1459 = vunpack.c.l.b16 %v1368
        %v1460 = vunpack.c.h.b16 %v1368
        %v1461 = vunpack.c.l.b16 %v1369
        %v1462 = vunpack.c.h.b16 %v1369
        %v1463 = vunpack.c.l.b16 %v1370
        %v1464 = vunpack.c.h.b16 %v1370
        %v1465 = vunpack.c.l.b16 %v1371
        %v1466 = vunpack.c.h.b16 %v1371
        %v1467 = vunpack.c.l.b16 %v1372
        %v1468 = vunpack.c.h.b16 %v1372
        %v1469 = vpack.c.b16 %v1407, %v1405
        %v1470 = vpack.c.b16 %v1408, %v1406
        %v1471 = vpack.c.b16 %v1411, %v1409
        %v1472 = vpack.c.b16 %v1412, %v1410
        %v1473 = vpack.c.b16 %v1415, %v1413
        %v1474 = vpack.c.b16 %v1416, %v1414
        %v1475 = vpack.c.b16 %v1419, %v1417
        %v1476 = vpack.c.b16 %v1420, %v1418
        %v1477 = vpack.c.b16 %v1423, %v1421
        %v1478 = vpack.c.b16 %v1424, %v1422
        %v1479 = vpack.c.b16 %v1427, %v1425
        %v1480 = vpack.c.b16 %v1428, %v1426
        %v1481 = vpack.c.b16 %v1431, %v1429
        %v1482 = vpack.c.b16 %v1432, %v1430
        %v1483 = vpack.c.b16 %v1435, %v1433
        %v1484 = vpack.c.b16 %v1436, %v1434
        %v1485 = vpack.c.b16 %v1439, %v1437
        %v1486 = vpack.c.b16 %v1440, %v1438
        %v1487 = vpack.c.b16 %v1443, %v1441
        %v1488 = vpack.c.b16 %v1444, %v1442
        %v1489 = vpack.c.b16 %v1447, %v1445
        %v1490 = vpack.c.b16 %v1448, %v1446
        %v1491 = vpack.c.b16 %v1451, %v1449
        %v1492 = vpack.c.b16 %v1452, %v1450
        %v1493 = vpack.c.b16 %v1455, %v1453
        %v1494 = vpack.c.b16 %v1456, %v1454
        %v1495 = vpack.c.b16 %v1459, %v1457
        %v1496 = vpack.c.b16 %v1460, %v1458
        %v1497 = vpack.c.b16 %v1463, %v1461
        %v1498 = vpack.c.b16 %v1464, %v1462
        %v1499 = vpack.c.b16 %v1467, %v1465
        %v1500 = vpack.c.b16 %v1468, %v1466
        %1533 = vmatprep.subr.bf16.mxu0 %v1484
        %1534 = vmatpush1.bf16.msra.mxu0 %v1483
        %1535 = vmatprep.subr.bf16.mxu0 %v1482
        %1536 = vmatpush1.bf16.msra.mxu0 %v1481
        %1537 = vmatprep.subr.bf16.mxu0 %v1480
        %1538 = vmatpush1.bf16.msra.mxu0 %v1479
        %1539 = vmatprep.subr.bf16.mxu0 %v1478
        %1540 = vmatpush1.bf16.msra.mxu0 %v1477
        %1541 = vmatprep.subr.bf16.mxu0 %v1476
        %1542 = vmatpush1.bf16.msra.mxu0 %v1475
        %1543 = vmatprep.subr.bf16.mxu0 %v1474
        %1544 = vmatpush1.bf16.msra.mxu0 %v1473
        %1545 = vmatprep.subr.bf16.mxu0 %v1472
        %1546 = vmatpush1.bf16.msra.mxu0 %v1471
        %1547 = vmatprep.subr.bf16.mxu0 %v1470
        %1548 = vmatpush1.bf16.msra.mxu0 %v1469
        %1549 = vmatprep.subr.bf16.mxu0 %v1500
        %1550 = vmatpush2.bf16.msra.mxu0 %v1499
        %1551 = vmatprep.subr.bf16.mxu0 %v1498
        %1552 = vmatpush2.bf16.msra.mxu0 %v1497
        %1553 = vmatprep.subr.bf16.mxu0 %v1496
        %1554 = vmatpush2.bf16.msra.mxu0 %v1495
        %1555 = vmatprep.subr.bf16.mxu0 %v1494
        %1556 = vmatpush2.bf16.msra.mxu0 %v1493
        %1557 = vmatprep.subr.bf16.mxu0 %v1492
        %1558 = vmatpush2.bf16.msra.mxu0 %v1491
        %1559 = vmatprep.subr.bf16.mxu0 %v1490
        %1560 = vmatpush2.bf16.msra.mxu0 %v1489
        %1561 = vmatprep.subr.bf16.mxu0 %v1488
        %1562 = vmatpush2.bf16.msra.mxu0 %v1487
        %1563 = vmatprep.subr.bf16.mxu0 %v1486
        %1564 = vmatpush2.bf16.msra.mxu0 %v1485
        %1565 = vmatprep.mubr.bf16.mxu0 %v1333
        %1566 = vmatmul.mubr.bf16.gmra.mxu0 %v1332
        %v1567 = vpop.f32.mrf.mxu0
        %v1568 = vadd.f32 0.0, %v1567
        %v1569 = vpop.f32.mrf.mxu0
        %v1570 = vadd.f32 0.0, %v1569
        %v1571 = vpop.f32.mrf.mxu0
        %v1572 = vadd.f32 0.0, %v1571
        %v1573 = vpop.f32.mrf.mxu0
        %v1574 = vadd.f32 0.0, %v1573
        %1575 = vmatprep.mubr.bf16.mxu0 %v1335
        %1576 = vmatmul.mubr.bf16.gmra.mxu0 %v1334
        %v1577 = vpop.f32.mrf.mxu0
        %v1578 = vadd.f32 0.0, %v1577
        %v1579 = vpop.f32.mrf.mxu0
        %v1580 = vadd.f32 0.0, %v1579
        %v1581 = vpop.f32.mrf.mxu0
        %v1582 = vadd.f32 0.0, %v1581
        %v1583 = vpop.f32.mrf.mxu0
        %v1584 = vadd.f32 0.0, %v1583
        %1585 = vmatprep.mubr.bf16.mxu0 %v1337
        %1586 = vmatmul.mubr.bf16.gmra.mxu0 %v1336
        %v1587 = vpop.f32.mrf.mxu0
        %v1588 = vadd.f32 0.0, %v1587
        %v1589 = vpop.f32.mrf.mxu0
        %v1590 = vadd.f32 0.0, %v1589
        %v1591 = vpop.f32.mrf.mxu0
        %v1592 = vadd.f32 0.0, %v1591
        %v1593 = vpop.f32.mrf.mxu0
        %v1594 = vadd.f32 0.0, %v1593
        %1595 = vmatprep.mubr.bf16.mxu0 %v1339
        %1596 = vmatmul.mubr.bf16.gmra.mxu0 %v1338
        %v1597 = vpop.f32.mrf.mxu0
        %v1598 = vadd.f32 0.0, %v1597
        %v1599 = vpop.f32.mrf.mxu0
        %v1600 = vadd.f32 0.0, %v1599
        %v1601 = vpop.f32.mrf.mxu0
        %v1602 = vadd.f32 0.0, %v1601
        %v1603 = vpop.f32.mrf.mxu0
        %v1604 = vadd.f32 0.0, %v1603
        %1605 = vdwg.mxu0
        %v1606 = vadd.f32 %v1237, %v1568
        %v1607 = vadd.f32 %v1239, %v1570
        %v1608 = vadd.f32 %v1241, %v1572
        %v1609 = vadd.f32 %v1243, %v1574
        %v1610 = vadd.f32 %v1247, %v1578
        %v1611 = vadd.f32 %v1249, %v1580
        %v1612 = vadd.f32 %v1251, %v1582
        %v1613 = vadd.f32 %v1253, %v1584
        %v1614 = vadd.f32 %v1257, %v1588
        %v1615 = vadd.f32 %v1259, %v1590
        %v1616 = vadd.f32 %v1261, %v1592
        %v1617 = vadd.f32 %v1263, %v1594
        %v1618 = vadd.f32 %v1267, %v1598
        %v1619 = vadd.f32 %v1269, %v1600
        %v1620 = vadd.f32 %v1271, %v1602
        %v1621 = vadd.f32 %v1273, %v1604
        %v1622 = vld [vmem:[%s4] sm:$0x3]
        %v1624 = vlaneseq
        %v1625 = vshrl.u32 %v1624, 7
        %v1626 = vsub.s32 0, %v1625
        %v1627 = vrot.slane %v1622, %v1626
        %v1628 = vlaneseq
        %v1629 = vshrl.u32 %v1628, 7
        %v1630 = vsub.s32 1, %v1629
        %v1631 = vrot.slane %v1622, %v1630
        %v1634 = vadd.f32 %v1606, %v1627
        %v1635 = vadd.f32 %v1607, %v1631
        %v1636 = vadd.f32 %v1608, %v1627
        %v1637 = vadd.f32 %v1609, %v1631
        %v1638 = vadd.f32 %v1610, %v1627
        %v1639 = vadd.f32 %v1611, %v1631
        %v1640 = vadd.f32 %v1612, %v1627
        %v1641 = vadd.f32 %v1613, %v1631
        %v1642 = vadd.f32 %v1614, %v1627
        %v1643 = vadd.f32 %v1615, %v1631
        %v1644 = vadd.f32 %v1616, %v1627
        %v1645 = vadd.f32 %v1617, %v1631
        %v1646 = vadd.f32 %v1618, %v1627
        %v1647 = vadd.f32 %v1619, %v1631
        %v1648 = vadd.f32 %v1620, %v1627
        %v1649 = vadd.f32 %v1621, %v1631
        %v1650 = vmax.f32 %v1634, 0.0
        %v1651 = vmax.f32 %v1635, 0.0
        %v1652 = vmax.f32 %v1636, 0.0
        %v1653 = vmax.f32 %v1637, 0.0
        %v1654 = vmax.f32 %v1638, 0.0
        %v1655 = vmax.f32 %v1639, 0.0
        %v1656 = vmax.f32 %v1640, 0.0
        %v1657 = vmax.f32 %v1641, 0.0
        %v1658 = vmax.f32 %v1642, 0.0
        %v1659 = vmax.f32 %v1643, 0.0
        %v1660 = vmax.f32 %v1644, 0.0
        %v1661 = vmax.f32 %v1645, 0.0
        %v1662 = vmax.f32 %v1646, 0.0
        %v1663 = vmax.f32 %v1647, 0.0
        %v1664 = vmax.f32 %v1648, 0.0
        %v1665 = vmax.f32 %v1649, 0.0
        %v1666 = vpack.c.bf16 %v1652, %v1650
        %v1667 = vpack.c.bf16 %v1653, %v1651
        %v1668 = vpack.c.bf16 %v1656, %v1654
        %v1669 = vpack.c.bf16 %v1657, %v1655
        %v1670 = vpack.c.bf16 %v1660, %v1658
        %v1671 = vpack.c.bf16 %v1661, %v1659
        %v1672 = vpack.c.bf16 %v1664, %v1662
        %v1673 = vpack.c.bf16 %v1665, %v1663
        %v1674 = vld [vmem:[#allocation8] sm:$0xff]
        %v1675 = vld [vmem:[#allocation8 + $0x8] sm:$0xff]
        %v1676 = vld [vmem:[#allocation8 + $0x10] sm:$0xff]
        %v1677 = vld [vmem:[#allocation8 + $0x18] sm:$0xff]
        %v1678 = vld [vmem:[#allocation8 + $0x20] sm:$0xff]
        %v1679 = vld [vmem:[#allocation8 + $0x28] sm:$0xff]
        %v1680 = vld [vmem:[#allocation8 + $0x30] sm:$0xff]
        %v1681 = vld [vmem:[#allocation8 + $0x38] sm:$0xff]
        %v1682 = vld [vmem:[#allocation8 + $0x40] sm:$0xff]
        %v1683 = vld [vmem:[#allocation8 + $0x48] sm:$0xff]
        %v1684 = vld [vmem:[#allocation8 + $0x50] sm:$0xff]
        %v1685 = vld [vmem:[#allocation8 + $0x58] sm:$0xff]
        %v1686 = vld [vmem:[#allocation8 + $0x60] sm:$0xff]
        %v1687 = vld [vmem:[#allocation8 + $0x68] sm:$0xff]
        %v1688 = vld [vmem:[#allocation8 + $0x70] sm:$0xff]
        %v1689 = vld [vmem:[#allocation8 + $0x78] sm:$0xff]
        %v1690 = vld [vmem:[#allocation8 + $0x80] sm:$0xff]
        %v1691 = vld [vmem:[#allocation8 + $0x88] sm:$0xff]
        %v1692 = vld [vmem:[#allocation8 + $0x90] sm:$0xff]
        %v1693 = vld [vmem:[#allocation8 + $0x98] sm:$0xff]
        %v1694 = vld [vmem:[#allocation8 + $0xa0] sm:$0xff]
        %v1695 = vld [vmem:[#allocation8 + $0xa8] sm:$0xff]
        %v1696 = vld [vmem:[#allocation8 + $0xb0] sm:$0xff]
        %v1697 = vld [vmem:[#allocation8 + $0xb8] sm:$0xff]
        %v1698 = vld [vmem:[#allocation8 + $0xc0] sm:$0xff]
        %v1699 = vld [vmem:[#allocation8 + $0xc8] sm:$0xff]
        %v1700 = vld [vmem:[#allocation8 + $0xd0] sm:$0xff]
        %v1701 = vld [vmem:[#allocation8 + $0xd8] sm:$0xff]
        %v1702 = vld [vmem:[#allocation8 + $0xe0] sm:$0xff]
        %v1703 = vld [vmem:[#allocation8 + $0xe8] sm:$0xff]
        %v1704 = vld [vmem:[#allocation8 + $0xf0] sm:$0xff]
        %v1705 = vld [vmem:[#allocation8 + $0xf8] sm:$0xff]
        %v1706 = vld [vmem:[%s6] sm:$0x3]
        %v1708 = vlaneseq
        %v1709 = vshrl.u32 %v1708, 7
        %v1710 = vsub.s32 0, %v1709
        %v1711 = vrot.slane %v1706, %v1710
        %v1712 = vlaneseq
        %v1713 = vshrl.u32 %v1712, 7
        %v1714 = vsub.s32 1, %v1713
        %v1715 = vrot.slane %v1706, %v1714
        %v1750 = vunpack.c.l.b16 %v1674
        %v1751 = vunpack.c.h.b16 %v1674
        %v1752 = vunpack.c.l.b16 %v1675
        %v1753 = vunpack.c.h.b16 %v1675
        %v1754 = vunpack.c.l.b16 %v1676
        %v1755 = vunpack.c.h.b16 %v1676
        %v1756 = vunpack.c.l.b16 %v1677
        %v1757 = vunpack.c.h.b16 %v1677
        %v1758 = vunpack.c.l.b16 %v1678
        %v1759 = vunpack.c.h.b16 %v1678
        %v1760 = vunpack.c.l.b16 %v1679
        %v1761 = vunpack.c.h.b16 %v1679
        %v1762 = vunpack.c.l.b16 %v1680
        %v1763 = vunpack.c.h.b16 %v1680
        %v1764 = vunpack.c.l.b16 %v1681
        %v1765 = vunpack.c.h.b16 %v1681
        %v1766 = vunpack.c.l.b16 %v1682
        %v1767 = vunpack.c.h.b16 %v1682
        %v1768 = vunpack.c.l.b16 %v1683
        %v1769 = vunpack.c.h.b16 %v1683
        %v1770 = vunpack.c.l.b16 %v1684
        %v1771 = vunpack.c.h.b16 %v1684
        %v1772 = vunpack.c.l.b16 %v1685
        %v1773 = vunpack.c.h.b16 %v1685
        %v1774 = vunpack.c.l.b16 %v1686
        %v1775 = vunpack.c.h.b16 %v1686
        %v1776 = vunpack.c.l.b16 %v1687
        %v1777 = vunpack.c.h.b16 %v1687
        %v1778 = vunpack.c.l.b16 %v1688
        %v1779 = vunpack.c.h.b16 %v1688
        %v1780 = vunpack.c.l.b16 %v1689
        %v1781 = vunpack.c.h.b16 %v1689
        %v1782 = vunpack.c.l.b16 %v1690
        %v1783 = vunpack.c.h.b16 %v1690
        %v1784 = vunpack.c.l.b16 %v1691
        %v1785 = vunpack.c.h.b16 %v1691
        %v1786 = vunpack.c.l.b16 %v1692
        %v1787 = vunpack.c.h.b16 %v1692
        %v1788 = vunpack.c.l.b16 %v1693
        %v1789 = vunpack.c.h.b16 %v1693
        %v1790 = vunpack.c.l.b16 %v1694
        %v1791 = vunpack.c.h.b16 %v1694
        %v1792 = vunpack.c.l.b16 %v1695
        %v1793 = vunpack.c.h.b16 %v1695
        %v1794 = vunpack.c.l.b16 %v1696
        %v1795 = vunpack.c.h.b16 %v1696
        %v1796 = vunpack.c.l.b16 %v1697
        %v1797 = vunpack.c.h.b16 %v1697
        %v1798 = vunpack.c.l.b16 %v1698
        %v1799 = vunpack.c.h.b16 %v1698
        %v1800 = vunpack.c.l.b16 %v1699
        %v1801 = vunpack.c.h.b16 %v1699
        %v1802 = vunpack.c.l.b16 %v1700
        %v1803 = vunpack.c.h.b16 %v1700
        %v1804 = vunpack.c.l.b16 %v1701
        %v1805 = vunpack.c.h.b16 %v1701
        %v1806 = vunpack.c.l.b16 %v1702
        %v1807 = vunpack.c.h.b16 %v1702
        %v1808 = vunpack.c.l.b16 %v1703
        %v1809 = vunpack.c.h.b16 %v1703
        %v1810 = vunpack.c.l.b16 %v1704
        %v1811 = vunpack.c.h.b16 %v1704
        %v1812 = vunpack.c.l.b16 %v1705
        %v1813 = vunpack.c.h.b16 %v1705
        %v1814 = vpack.c.b16 %v1752, %v1750
        %v1815 = vpack.c.b16 %v1753, %v1751
        %v1816 = vpack.c.b16 %v1756, %v1754
        %v1817 = vpack.c.b16 %v1757, %v1755
        %v1818 = vpack.c.b16 %v1760, %v1758
        %v1819 = vpack.c.b16 %v1761, %v1759
        %v1820 = vpack.c.b16 %v1764, %v1762
        %v1821 = vpack.c.b16 %v1765, %v1763
        %v1822 = vpack.c.b16 %v1768, %v1766
        %v1823 = vpack.c.b16 %v1769, %v1767
        %v1824 = vpack.c.b16 %v1772, %v1770
        %v1825 = vpack.c.b16 %v1773, %v1771
        %v1826 = vpack.c.b16 %v1776, %v1774
        %v1827 = vpack.c.b16 %v1777, %v1775
        %v1828 = vpack.c.b16 %v1780, %v1778
        %v1829 = vpack.c.b16 %v1781, %v1779
        %v1830 = vpack.c.b16 %v1784, %v1782
        %v1831 = vpack.c.b16 %v1785, %v1783
        %v1832 = vpack.c.b16 %v1788, %v1786
        %v1833 = vpack.c.b16 %v1789, %v1787
        %v1834 = vpack.c.b16 %v1792, %v1790
        %v1835 = vpack.c.b16 %v1793, %v1791
        %v1836 = vpack.c.b16 %v1796, %v1794
        %v1837 = vpack.c.b16 %v1797, %v1795
        %v1838 = vpack.c.b16 %v1800, %v1798
        %v1839 = vpack.c.b16 %v1801, %v1799
        %v1840 = vpack.c.b16 %v1804, %v1802
        %v1841 = vpack.c.b16 %v1805, %v1803
        %v1842 = vpack.c.b16 %v1808, %v1806
        %v1843 = vpack.c.b16 %v1809, %v1807
        %v1844 = vpack.c.b16 %v1812, %v1810
        %v1845 = vpack.c.b16 %v1813, %v1811
        %1878 = vmatprep.subr.bf16.mxu0 %v1829
        %1879 = vmatpush1.bf16.msra.mxu0 %v1828
        %1880 = vmatprep.subr.bf16.mxu0 %v1827
        %1881 = vmatpush1.bf16.msra.mxu0 %v1826
        %1882 = vmatprep.subr.bf16.mxu0 %v1825
        %1883 = vmatpush1.bf16.msra.mxu0 %v1824
        %1884 = vmatprep.subr.bf16.mxu0 %v1823
        %1885 = vmatpush1.bf16.msra.mxu0 %v1822
        %1886 = vmatprep.subr.bf16.mxu0 %v1821
        %1887 = vmatpush1.bf16.msra.mxu0 %v1820
        %1888 = vmatprep.subr.bf16.mxu0 %v1819
        %1889 = vmatpush1.bf16.msra.mxu0 %v1818
        %1890 = vmatprep.subr.bf16.mxu0 %v1817
        %1891 = vmatpush1.bf16.msra.mxu0 %v1816
        %1892 = vmatprep.subr.bf16.mxu0 %v1815
        %1893 = vmatpush1.bf16.msra.mxu0 %v1814
        %1894 = vmatprep.subr.bf16.mxu0 %v1845
        %1895 = vmatpush2.bf16.msra.mxu0 %v1844
        %1896 = vmatprep.subr.bf16.mxu0 %v1843
        %1897 = vmatpush2.bf16.msra.mxu0 %v1842
        %1898 = vmatprep.subr.bf16.mxu0 %v1841
        %1899 = vmatpush2.bf16.msra.mxu0 %v1840
        %1900 = vmatprep.subr.bf16.mxu0 %v1839
        %1901 = vmatpush2.bf16.msra.mxu0 %v1838
        %1902 = vmatprep.subr.bf16.mxu0 %v1837
        %1903 = vmatpush2.bf16.msra.mxu0 %v1836
        %1904 = vmatprep.subr.bf16.mxu0 %v1835
        %1905 = vmatpush2.bf16.msra.mxu0 %v1834
        %1906 = vmatprep.subr.bf16.mxu0 %v1833
        %1907 = vmatpush2.bf16.msra.mxu0 %v1832
        %1908 = vmatprep.subr.bf16.mxu0 %v1831
        %1909 = vmatpush2.bf16.msra.mxu0 %v1830
        %1910 = vmatprep.mubr.bf16.mxu0 %v1667
        %1911 = vmatmul.mubr.bf16.gmra.mxu0 %v1666
        %v1912 = vpop.f32.mrf.mxu0
        %v1913 = vadd.f32 %v1711, %v1912
        %v1914 = vpop.f32.mrf.mxu0
        %v1915 = vadd.f32 %v1715, %v1914
        %v1916 = vpop.f32.mrf.mxu0
        %v1917 = vadd.f32 %v1711, %v1916
        %v1918 = vpop.f32.mrf.mxu0
        %v1919 = vadd.f32 %v1715, %v1918
        %1920 = vmatprep.mubr.bf16.mxu0 %v1669
        %1921 = vmatmul.mubr.bf16.gmra.mxu0 %v1668
        %v1922 = vpop.f32.mrf.mxu0
        %v1923 = vadd.f32 %v1711, %v1922
        %v1924 = vpop.f32.mrf.mxu0
        %v1925 = vadd.f32 %v1715, %v1924
        %v1926 = vpop.f32.mrf.mxu0
        %v1927 = vadd.f32 %v1711, %v1926
        %v1928 = vpop.f32.mrf.mxu0
        %v1929 = vadd.f32 %v1715, %v1928
        %1930 = vmatprep.mubr.bf16.mxu0 %v1671
        %1931 = vmatmul.mubr.bf16.gmra.mxu0 %v1670
        %v1932 = vpop.f32.mrf.mxu0
        %v1933 = vadd.f32 %v1711, %v1932
        %v1934 = vpop.f32.mrf.mxu0
        %v1935 = vadd.f32 %v1715, %v1934
        %v1936 = vpop.f32.mrf.mxu0
        %v1937 = vadd.f32 %v1711, %v1936
        %v1938 = vpop.f32.mrf.mxu0
        %v1939 = vadd.f32 %v1715, %v1938
        %1940 = vmatprep.mubr.bf16.mxu0 %v1673
        %1941 = vmatmul.mubr.bf16.gmra.mxu0 %v1672
        %v1942 = vpop.f32.mrf.mxu0
        %v1943 = vadd.f32 %v1711, %v1942
        %v1944 = vpop.f32.mrf.mxu0
        %v1945 = vadd.f32 %v1715, %v1944
        %v1946 = vpop.f32.mrf.mxu0
        %v1947 = vadd.f32 %v1711, %v1946
        %v1948 = vpop.f32.mrf.mxu0
        %v1949 = vadd.f32 %v1715, %v1948
        %1950 = vdwg.mxu0
        %v1951 = vld [vmem:[#allocation10] sm:$0xff]
        %v1952 = vld [vmem:[#allocation10 + $0x8] sm:$0xff]
        %v1953 = vld [vmem:[#allocation10 + $0x10] sm:$0xff]
        %v1954 = vld [vmem:[#allocation10 + $0x18] sm:$0xff]
        %v1955 = vld [vmem:[#allocation10 + $0x20] sm:$0xff]
        %v1956 = vld [vmem:[#allocation10 + $0x28] sm:$0xff]
        %v1957 = vld [vmem:[#allocation10 + $0x30] sm:$0xff]
        %v1958 = vld [vmem:[#allocation10 + $0x38] sm:$0xff]
        %v1959 = vld [vmem:[#allocation10 + $0x40] sm:$0xff]
        %v1960 = vld [vmem:[#allocation10 + $0x48] sm:$0xff]
        %v1961 = vld [vmem:[#allocation10 + $0x50] sm:$0xff]
        %v1962 = vld [vmem:[#allocation10 + $0x58] sm:$0xff]
        %v1963 = vld [vmem:[#allocation10 + $0x60] sm:$0xff]
        %v1964 = vld [vmem:[#allocation10 + $0x68] sm:$0xff]
        %v1965 = vld [vmem:[#allocation10 + $0x70] sm:$0xff]
        %v1966 = vld [vmem:[#allocation10 + $0x78] sm:$0xff]
        %v1967 = vld [vmem:[%s8] sm:$0x3]
        %v1969 = vlaneseq
        %v1970 = vshrl.u32 %v1969, 7
        %v1971 = vsub.s32 0, %v1970
        %v1972 = vrot.slane %v1967, %v1971
        %v1973 = vlaneseq
        %v1974 = vshrl.u32 %v1973, 7
        %v1975 = vsub.s32 1, %v1974
        %v1976 = vrot.slane %v1967, %v1975
        %v1995 = vunpack.c.l.b16 %v1951
        %v1996 = vunpack.c.h.b16 %v1951
        %v1997 = vunpack.c.l.b16 %v1952
        %v1998 = vunpack.c.h.b16 %v1952
        %v1999 = vunpack.c.l.b16 %v1953
        %v2000 = vunpack.c.h.b16 %v1953
        %v2001 = vunpack.c.l.b16 %v1954
        %v2002 = vunpack.c.h.b16 %v1954
        %v2003 = vunpack.c.l.b16 %v1955
        %v2004 = vunpack.c.h.b16 %v1955
        %v2005 = vunpack.c.l.b16 %v1956
        %v2006 = vunpack.c.h.b16 %v1956
        %v2007 = vunpack.c.l.b16 %v1957
        %v2008 = vunpack.c.h.b16 %v1957
        %v2009 = vunpack.c.l.b16 %v1958
        %v2010 = vunpack.c.h.b16 %v1958
        %v2011 = vunpack.c.l.b16 %v1959
        %v2012 = vunpack.c.h.b16 %v1959
        %v2013 = vunpack.c.l.b16 %v1960
        %v2014 = vunpack.c.h.b16 %v1960
        %v2015 = vunpack.c.l.b16 %v1961
        %v2016 = vunpack.c.h.b16 %v1961
        %v2017 = vunpack.c.l.b16 %v1962
        %v2018 = vunpack.c.h.b16 %v1962
        %v2019 = vunpack.c.l.b16 %v1963
        %v2020 = vunpack.c.h.b16 %v1963
        %v2021 = vunpack.c.l.b16 %v1964
        %v2022 = vunpack.c.h.b16 %v1964
        %v2023 = vunpack.c.l.b16 %v1965
        %v2024 = vunpack.c.h.b16 %v1965
        %v2025 = vunpack.c.l.b16 %v1966
        %v2026 = vunpack.c.h.b16 %v1966
        %v2027 = vpack.c.b16 %v1997, %v1995
        %v2028 = vpack.c.b16 %v1998, %v1996
        %v2029 = vpack.c.b16 %v2001, %v1999
        %v2030 = vpack.c.b16 %v2002, %v2000
        %v2031 = vpack.c.b16 %v2005, %v2003
        %v2032 = vpack.c.b16 %v2006, %v2004
        %v2033 = vpack.c.b16 %v2009, %v2007
        %v2034 = vpack.c.b16 %v2010, %v2008
        %v2035 = vpack.c.b16 %v2013, %v2011
        %v2036 = vpack.c.b16 %v2014, %v2012
        %v2037 = vpack.c.b16 %v2017, %v2015
        %v2038 = vpack.c.b16 %v2018, %v2016
        %v2039 = vpack.c.b16 %v2021, %v2019
        %v2040 = vpack.c.b16 %v2022, %v2020
        %v2041 = vpack.c.b16 %v2025, %v2023
        %v2042 = vpack.c.b16 %v2026, %v2024
        %2059 = vmatprep.subr.bf16.mxu0 %v2042
        %2060 = vmatpush1.bf16.msra.mxu0 %v2041
        %2061 = vmatprep.subr.bf16.mxu0 %v2040
        %2062 = vmatpush1.bf16.msra.mxu0 %v2039
        %2063 = vmatprep.subr.bf16.mxu0 %v2038
        %2064 = vmatpush1.bf16.msra.mxu0 %v2037
        %2065 = vmatprep.subr.bf16.mxu0 %v2036
        %2066 = vmatpush1.bf16.msra.mxu0 %v2035
        %2067 = vmatprep.subr.bf16.mxu0 %v2034
        %2068 = vmatpush1.bf16.msra.mxu0 %v2033
        %2069 = vmatprep.subr.bf16.mxu0 %v2032
        %2070 = vmatpush1.bf16.msra.mxu0 %v2031
        %2071 = vmatprep.subr.bf16.mxu0 %v2030
        %2072 = vmatpush1.bf16.msra.mxu0 %v2029
        %2073 = vmatprep.subr.bf16.mxu0 %v2028
        %2074 = vmatpush1.bf16.msra.mxu0 %v2027
        %2075 = vmatprep.subr.bf16.mxu0 0
        %2076 = vmatpush2.bf16.msra.mxu0 0
        %2077 = vmatprep.subr.bf16.mxu0 0
        %2078 = vmatpush2.bf16.msra.mxu0 0
        %2079 = vmatprep.subr.bf16.mxu0 0
        %2080 = vmatpush2.bf16.msra.mxu0 0
        %2081 = vmatprep.subr.bf16.mxu0 0
        %2082 = vmatpush2.bf16.msra.mxu0 0
        %2083 = vmatprep.subr.bf16.mxu0 0
        %2084 = vmatpush2.bf16.msra.mxu0 0
        %2085 = vmatprep.subr.bf16.mxu0 0
        %2086 = vmatpush2.bf16.msra.mxu0 0
        %2087 = vmatprep.subr.bf16.mxu0 0
        %2088 = vmatpush2.bf16.msra.mxu0 0
        %2089 = vmatprep.subr.bf16.mxu0 0
        %2090 = vmatpush2.bf16.msra.mxu0 0
        %2091 = vmatprep.mubr.bf16.mxu0 0
        %2092 = vmatmul.mubr.bf16.gmra.mxu0 %v471
        %v2093 = vpop.f32.mrf.mxu0
        %v2094 = vadd.f32 %v1972, %v2093
        %v2095 = vpop.f32.mrf.mxu0
        %v2096 = vadd.f32 %v1976, %v2095
        %v2097 = vpop.f32.mrf.mxu0
        %v2098 = vadd.f32 %v1972, %v2097
        %v2099 = vpop.f32.mrf.mxu0
        %v2100 = vadd.f32 %v1976, %v2099
        %2101 = vmatprep.mubr.bf16.mxu0 0
        %2102 = vmatmul.mubr.bf16.gmra.mxu0 %v472
        %v2103 = vpop.f32.mrf.mxu0
        %v2104 = vadd.f32 %v1972, %v2103
        %v2105 = vpop.f32.mrf.mxu0
        %v2106 = vadd.f32 %v1976, %v2105
        %v2107 = vpop.f32.mrf.mxu0
        %v2108 = vadd.f32 %v1972, %v2107
        %v2109 = vpop.f32.mrf.mxu0
        %v2110 = vadd.f32 %v1976, %v2109
        %2111 = vmatprep.mubr.bf16.mxu0 0
        %2112 = vmatmul.mubr.bf16.gmra.mxu0 %v473
        %v2113 = vpop.f32.mrf.mxu0
        %v2114 = vadd.f32 %v1972, %v2113
        %v2115 = vpop.f32.mrf.mxu0
        %v2116 = vadd.f32 %v1976, %v2115
        %v2117 = vpop.f32.mrf.mxu0
        %v2118 = vadd.f32 %v1972, %v2117
        %v2119 = vpop.f32.mrf.mxu0
        %v2120 = vadd.f32 %v1976, %v2119
        %2121 = vmatprep.mubr.bf16.mxu0 0
        %2122 = vmatmul.mubr.bf16.gmra.mxu0 %v474
        %v2123 = vpop.f32.mrf.mxu0
        %v2124 = vadd.f32 %v1972, %v2123
        %v2125 = vpop.f32.mrf.mxu0
        %v2126 = vadd.f32 %v1976, %v2125
        %v2127 = vpop.f32.mrf.mxu0
        %v2128 = vadd.f32 %v1972, %v2127
        %v2129 = vpop.f32.mrf.mxu0
        %v2130 = vadd.f32 %v1976, %v2129
        %2131 = vdwg.mxu0
        %v2132 = vadd.f32 %v1913, %v2094
        %v2133 = vadd.f32 %v1915, %v2096
        %v2134 = vadd.f32 %v1917, %v2098
        %v2135 = vadd.f32 %v1919, %v2100
        %v2136 = vadd.f32 %v1923, %v2104
        %v2137 = vadd.f32 %v1925, %v2106
        %v2138 = vadd.f32 %v1927, %v2108
        %v2139 = vadd.f32 %v1929, %v2110
        %v2140 = vadd.f32 %v1933, %v2114
        %v2141 = vadd.f32 %v1935, %v2116
        %v2142 = vadd.f32 %v1937, %v2118
        %v2143 = vadd.f32 %v1939, %v2120
        %v2144 = vadd.f32 %v1943, %v2124
        %v2145 = vadd.f32 %v1945, %v2126
        %v2146 = vadd.f32 %v1947, %v2128
        %v2147 = vadd.f32 %v1949, %v2130
        %v2148 = vmax.f32 %v2132, 0.0
        %v2149 = vmax.f32 %v2133, 0.0
        %v2150 = vmax.f32 %v2134, 0.0
        %v2151 = vmax.f32 %v2135, 0.0
        %v2152 = vmax.f32 %v2136, 0.0
        %v2153 = vmax.f32 %v2137, 0.0
        %v2154 = vmax.f32 %v2138, 0.0
        %v2155 = vmax.f32 %v2139, 0.0
        %v2156 = vmax.f32 %v2140, 0.0
        %v2157 = vmax.f32 %v2141, 0.0
        %v2158 = vmax.f32 %v2142, 0.0
        %v2159 = vmax.f32 %v2143, 0.0
        %v2160 = vmax.f32 %v2144, 0.0
        %v2161 = vmax.f32 %v2145, 0.0
        %v2162 = vmax.f32 %v2146, 0.0
        %v2163 = vmax.f32 %v2147, 0.0
        %v2164 = vsel %vm648, %v2148, 0.0
        %v2165 = vsel %vm648, %v2149, 0.0
        %v2166 = vsel %vm649, %v2150, 0.0
        %v2167 = vsel %vm649, %v2151, 0.0
        %v2168 = vsel %vm650, %v2152, 0.0
        %v2169 = vsel %vm650, %v2153, 0.0
        %v2170 = vsel %vm651, %v2154, 0.0
        %v2171 = vsel %vm651, %v2155, 0.0
        %v2172 = vsel %vm652, %v2156, 0.0
        %v2173 = vsel %vm652, %v2157, 0.0
        %v2174 = vsel %vm653, %v2158, 0.0
        %v2175 = vsel %vm653, %v2159, 0.0
        %v2176 = vsel %vm654, %v2160, 0.0
        %v2177 = vsel %vm654, %v2161, 0.0
        %v2178 = vsel %vm655, %v2162, 0.0
        %v2179 = vsel %vm655, %v2163, 0.0
        %v2180 = vpack.c.bf16 %v2166, %v2164
        %v2181 = vpack.c.bf16 %v2167, %v2165
        %v2182 = vpack.c.bf16 %v2170, %v2168
        %v2183 = vpack.c.bf16 %v2171, %v2169
        %v2184 = vpack.c.bf16 %v2174, %v2172
        %v2185 = vpack.c.bf16 %v2175, %v2173
        %v2186 = vpack.c.bf16 %v2178, %v2176
        %v2187 = vpack.c.bf16 %v2179, %v2177
        %v2196 = vunpack.c.l.b16 %v2180
        %v2197 = vunpack.c.l.b16 %v2181
        %v2198 = vunpack.c.h.b16 %v2180
        %v2199 = vunpack.c.h.b16 %v2181
        %v2200 = vunpack.c.l.b16 %v2182
        %v2201 = vunpack.c.l.b16 %v2183
        %v2202 = vunpack.c.h.b16 %v2182
        %v2203 = vunpack.c.h.b16 %v2183
        %v2204 = vunpack.c.l.b16 %v2184
        %v2205 = vunpack.c.l.b16 %v2185
        %v2206 = vunpack.c.h.b16 %v2184
        %v2207 = vunpack.c.h.b16 %v2185
        %v2208 = vunpack.c.l.b16 %v2186
        %v2209 = vunpack.c.l.b16 %v2187
        %v2210 = vunpack.c.h.b16 %v2186
        %v2211 = vunpack.c.h.b16 %v2187
        %v2212 = vpack.c.b16 %v2197, %v2196
        %v2213 = vpack.c.b16 %v2199, %v2198
        %v2214 = vpack.c.b16 %v2201, %v2200
        %v2215 = vpack.c.b16 %v2203, %v2202
        %v2216 = vpack.c.b16 %v2205, %v2204
        %v2217 = vpack.c.b16 %v2207, %v2206
        %v2218 = vpack.c.b16 %v2209, %v2208
        %v2219 = vpack.c.b16 %v2211, %v2210
        %2228 = vst [vmem:[%s408] sm:$0xff] %v2212
        %2229 = vst [vmem:[%s408 + $0x8] sm:$0xff] %v2213
        %2230 = vst [vmem:[%s408 + $0x10] sm:$0xff] %v2214
        %2231 = vst [vmem:[%s408 + $0x18] sm:$0xff] %v2215
        %2232 = vst [vmem:[%s408 + $0x20] sm:$0xff] %v2216
        %2233 = vst [vmem:[%s408 + $0x28] sm:$0xff] %v2217
        %2234 = vst [vmem:[%s408 + $0x30] sm:$0xff] %v2218
        %2235 = vst [vmem:[%s408 + $0x38] sm:$0xff] %v2219
        %s2236 = sand.u32 %s230, 1
        %s2237 = scalar_lea.sflag [#allocation4], %s2236
        %s2238 = sand.u32 %s230, 1
        %s2239 = smul.addr %s2238, 64
        %s2240 = scalar_lea.vmem [#allocation11], %s2239
        // Predicated region
        $region77: #{tpu_custom_call.1} parent=55 // pred_check
          %p2241 = pneg %p240
        $region78: #{tpu_custom_call.1} parent=55 // pred_check_branch
          %2243 = sbr.rel (%p2241) target = $region80
        $region79: #{tpu_custom_call.1} parent=55 // pred_region
          %s2245 = ssub.s32 1024, 1024
          %2246 = vsyncadd %s2237, %s2245
          %s2247 = smul.addr %s28, 16
          %s2248 = smul.addr %s2247, 64
          %s2249 = scalar_lea.hbm %s9, %s2248
          %s2250 = sshll.u32 %s2240, 4
          %s2251 = int_to_ptr.vmem [resolvable:$true] %s2250
          %2256 = dma.vmem_to_hbm [thread:$0]  %s2251, 1024, %s2249, %s2237, 128, 128, 8
        $region80: #{tpu_custom_call.1} parent=55 // pred_fallthru
          _
      $region56: #{tpu_custom_call.1} parent=5 // pred_fallthru
        _
      %p2257 = scmp.le.s32.totalorder 2, %s23
      // Predicated region
      $region81: #{tpu_custom_call.1} parent=5 // pred_check
        %p2258 = pneg %p2257
      $region82: #{tpu_custom_call.1} parent=5 // pred_check_branch
        %2260 = sbr.rel (%p2258) target = $region84
      $region83: #{tpu_custom_call.1} parent=5 // pred_region
        %s2261 = ssub.s32 %s23, 2
        // Predicated region
        $region85: #{tpu_custom_call.1} parent=83 // pred_check
          %p2262 = pneg %p246
        $region86: #{tpu_custom_call.1} parent=83 // pred_check_branch
          %2264 = sbr.rel (%p2262) target = $region88
        $region87: #{tpu_custom_call.1} parent=83 // pred_region
          %s2265 = sand.u32 %s231, 1
          %s2266 = scalar_lea.sflag [#allocation4], %s2265
          %s2267 = sand.u32 %s231, 1
          %s2268 = smul.addr %s2267, 64
          %s2269 = scalar_lea.vmem [#allocation11], %s2268
          %2270 = dma.done %s2266, 1024
        $region88: #{tpu_custom_call.1} parent=83 // pred_fallthru
          _
      $region84: #{tpu_custom_call.1} parent=5 // pred_fallthru
        _
    $region6: #{tpu_custom_call.1} parent=1 // loop_footer
      %s27 = sadd.s32 1, %s23
    $region7: #{tpu_custom_call.1} parent=1 // loop_footer_branch
      %22 = sbr.rel target = $region3
    $region8: #{tpu_custom_call.1} parent=1 // loop_exit
      _
    %2271 = vsyncpa [#allocation3], 1
    %s2272 = scalar_lea.sflag [#allocation3], 1
    %2273 = vsyncpa %s2272, 1
    %2274 = vsyncpa [#allocation6], 1
    %2275 = vsyncpa [#allocation9], 1
    %2276 = vsyncpa [#allocation4], 1
    %s2277 = scalar_lea.sflag [#allocation4], 1
    %2278 = vsyncpa %s2277, 1

</llo_original>
